<compile_context>
chip_gen: v7x
topology: tpu7x:2x2x1
jax: 0.10.0
libtpu: 0.0.40
codegen_flags: <defaults>
</compile_context>

<pallas_src>
import functools

import jax
import jax.numpy as jnp
from jax import lax
from jax.experimental import pallas as pl
from jax.experimental.pallas import tpu as pltpu


# ---------------------------------------------------------------------------
# Helpers
# ---------------------------------------------------------------------------

def _round_up(v, m=128):
    return ((v + m - 1) // m) * m


def _pad2d(a, rows, cols):
    return jnp.pad(a, ((0, rows - a.shape[0]), (0, cols - a.shape[1])))


def _full_spec(shape):
    # Full-array block (block_shape == array shape satisfies the (8,128) rule).
    return pl.BlockSpec(shape, lambda i: (0,) * len(shape))


# ---------------------------------------------------------------------------
# Fused forward kernel
# ---------------------------------------------------------------------------

def dgi_fused_kernel(
    x_ref, sg_ref, sg2_ref, adj_ref,
    w1_ref, b1_ref, w2_ref, b2_ref,
    wdt_ref, bd_ref,
    d1w1_ref, d1b1_ref, d1w2_ref, d1b2_ref, d1w3_ref, d1b3_ref,
    d2w1_ref, d2b1_ref, d2w2_ref, d2b2_ref, d2w3_ref, d2b3_ref,
    logits_ref, loss_ref,
    *, inv_mse_count,
):
    f32 = jnp.float32
    bf16 = jnp.bfloat16

    x = x_ref[...]        # [N, Fp]  f32 (lane-padded features)
    sg = sg_ref[...]      # [N, 1]   f32 subgraph mask
    sg2 = sg2_ref[...]    # [N, 1]   f32 corrupted-subgraph mask
    adj = adj_ref[...]    # [N, N]   bf16

    N = x.shape[0]

    # ---- GCN layer 1: shared projection, per-row mask commutes with X @ W ----
    xw = jnp.dot(x.astype(bf16), w1_ref[...], preferred_element_type=f32)        # [N, Hp]
    h1_l1 = jnp.maximum(
        jnp.dot(adj, (xw * sg).astype(bf16), preferred_element_type=f32) + b1_ref[...], 0.0)
    h2_l1 = jnp.maximum(
        jnp.dot(adj, (xw * sg2).astype(bf16), preferred_element_type=f32) + b1_ref[...], 0.0)

    # ---- GCN layer 2 (subgraph branch only) ----
    hw2 = jnp.dot((h1_l1 * sg).astype(bf16), w2_ref[...], preferred_element_type=f32)
    h1_l2 = jnp.maximum(
        jnp.dot(adj, hw2.astype(bf16), preferred_element_type=f32) + b2_ref[...], 0.0)

    # ---- AvgReadout + sigmoid -> context c_out [1, Hp] ----
    s = jnp.sum(h1_l2 * sg, axis=0, keepdims=True)                    # [1, Hp]
    denom = jnp.maximum(jnp.sum(sg, axis=0, keepdims=True), 1e-12)    # [1, 1], clamped
    c_out = jax.nn.sigmoid(s * pl.reciprocal(denom, approx=True))

    # ---- Discriminator (nn.Bilinear(n_h, n_h, 1)): sc[n] = h[n] . (W @ c) + b ----
    u = jnp.dot(c_out.astype(bf16), wdt_ref[...], preferred_element_type=f32)    # [1, Hp]
    ub = u.astype(bf16)
    # Lane-oriented score rows via A @ B^T (contract last dims): [1,Hp] x [N,Hp] -> [1,N]
    sc1 = lax.dot_general(ub, h1_l1.astype(bf16),
                          dimension_numbers=(((1,), (1,)), ((), ())),
                          preferred_element_type=f32)
    sc2 = lax.dot_general(ub, h2_l1.astype(bf16),
                          dimension_numbers=(((1,), (1,)), ((), ())),
                          preferred_element_type=f32)
    bd = bd_ref[...]                                                  # [1, 1]
    # logits = cat((sc_1, sc_2), dim=1) -> [1, 2N], written lane-dense in-kernel.
    logits_ref[:, 0:N] = sc1 + bd
    logits_ref[:, N:2 * N] = sc2 + bd

    # ---- FNN decoders (3-layer MLP) + MSE losses, summed ----
    def fnn(h, w1, b1, w2, b2, w3, b3):
        z = jnp.maximum(jnp.dot(h.astype(bf16), w1, preferred_element_type=f32) + b1, 0.0)
        z = jnp.maximum(jnp.dot(z.astype(bf16), w2, preferred_element_type=f32) + b2, 0.0)
        return jnp.dot(z.astype(bf16), w3, preferred_element_type=f32) + b3

    dec1 = fnn(h1_l1, d1w1_ref[...], d1b1_ref[...], d1w2_ref[...], d1b2_ref[...],
               d1w3_ref[...], d1b3_ref[...])
    dec2 = fnn(h1_l2, d2w1_ref[...], d2b1_ref[...], d2w2_ref[...], d2b2_ref[...],
               d2w3_ref[...], d2b3_ref[...])
    diff1 = dec1 - x          # padded cols are exactly zero on both sides
    diff2 = dec2 - x
    sse = jnp.sum(diff1 * diff1) + jnp.sum(diff2 * diff2)
    loss_ref[...] = jnp.broadcast_to(sse * inv_mse_count, (1, 1))


# ---------------------------------------------------------------------------
# Parameter preparation (one-time padding / bf16 cast / pre-transpose)
# ---------------------------------------------------------------------------

def prepare_params(params):
    n_in, n_h = params["w_g1"].shape
    Fp, Hp = _round_up(n_in), _round_up(n_h)
    bf16, f32 = jnp.bfloat16, jnp.float32

    def w(name, r, c):
        return _pad2d(params[name], r, c).astype(bf16)

    def b(name, c):
        return _pad2d(params[name], 1, c).astype(f32)

    return {
        "n_in": n_in, "n_h": n_h, "Fp": Fp, "Hp": Hp,
        "w_g1": w("w_g1", Fp, Hp), "b_g1": b("b_g1", Hp),
        "w_g2": w("w_g2", Hp, Hp), "b_g2": b("b_g2", Hp),
        # pre-transposed bilinear weight: u = c @ W_disc^T
        "w_disc_t": _pad2d(params["w_disc"].T, Hp, Hp).astype(bf16),
        "b_disc": jnp.reshape(params["b_disc"], (1, 1)).astype(f32),
        "d1_w1": w("d1_w1", Hp, Hp), "d1_b1": b("d1_b1", Hp),
        "d1_w2": w("d1_w2", Hp, Hp), "d1_b2": b("d1_b2", Hp),
        "d1_w3": w("d1_w3", Hp, Fp), "d1_b3": b("d1_b3", Fp),
        "d2_w1": w("d2_w1", Hp, Hp), "d2_b1": b("d2_b1", Hp),
        "d2_w2": w("d2_w2", Hp, Hp), "d2_b2": b("d2_b2", Hp),
        "d2_w3": w("d2_w3", Hp, Fp), "d2_b3": b("d2_b3", Fp),
    }


# ---------------------------------------------------------------------------
# DGI forward (mirrors DGI.forward: returns (logits, feature_loss + feature_loss2))
# ---------------------------------------------------------------------------

def dgi_forward(prepped, seq1, subgraph, subgraph2, adj, msk=None):
    # `msk` only feeds the reference's `c = sigm(read(h_1_l1, msk))`, which is never used
    # downstream in forward() — dead work removed per the performance review.
    del msk

    x = seq1[0].astype(jnp.float32)          # [N, n_in], B == 1
    N, n_in = x.shape
    assert n_in == prepped["n_in"]
    Fp = prepped["Fp"]

    x_p = _pad2d(x, N, Fp)                   # lane-pad features
    adj_b = adj.astype(jnp.bfloat16)         # MXU-native, halves adj DMA bytes
    sg = subgraph.astype(jnp.float32)
    sg2 = subgraph2.astype(jnp.float32)

    kernel = functools.partial(dgi_fused_kernel, inv_mse_count=1.0 / (N * n_in))

    args = (x_p, sg, sg2, adj_b,
            prepped["w_g1"], prepped["b_g1"], prepped["w_g2"], prepped["b_g2"],
            prepped["w_disc_t"], prepped["b_disc"],
            prepped["d1_w1"], prepped["d1_b1"], prepped["d1_w2"], prepped["d1_b2"],
            prepped["d1_w3"], prepped["d1_b3"],
            prepped["d2_w1"], prepped["d2_b1"], prepped["d2_w2"], prepped["d2_b2"],
            prepped["d2_w3"], prepped["d2_b3"])

    logits, loss = pl.pallas_call(
        kernel,
        grid=(1,),
        in_specs=[_full_spec(a.shape) for a in args],
        out_specs=(_full_spec((1, 2 * N)), _full_spec((1, 1))),
        out_shape=(jax.ShapeDtypeStruct((1, 2 * N), jnp.float32),
                   jax.ShapeDtypeStruct((1, 1), jnp.float32)),
        compiler_params=pltpu.CompilerParams(
            dimension_semantics=("arbitrary",),
            vmem_limit_bytes=32 * 1024 * 1024),
    )(*args)
    return logits, loss[0, 0]


# ---------------------------------------------------------------------------
# Parameter init (PyTorch-layout params, then prepared once for the kernel)
# ---------------------------------------------------------------------------

def init_params(key, n_in, n_h):
    ks = jax.random.split(key, 12)
    s = 0.1
    return {
        "w_g1": jax.random.normal(ks[0], (n_in, n_h), jnp.float32) * s,
        "b_g1": jnp.zeros((1, n_h), jnp.float32),
        "w_g2": jax.random.normal(ks[1], (n_h, n_h), jnp.float32) * s,
        "b_g2": jnp.zeros((1, n_h), jnp.float32),
        "w_disc": jax.random.normal(ks[2], (n_h, n_h), jnp.float32) * s,
        "b_disc": jnp.zeros((), jnp.float32),
        # feature_decoder: FNN(n_h, n_h, n_in, 3)
        "d1_w1": jax.random.normal(ks[3], (n_h, n_h), jnp.float32) * s,
        "d1_b1": jnp.zeros((1, n_h), jnp.float32),
        "d1_w2": jax.random.normal(ks[4], (n_h, n_h), jnp.float32) * s,
        "d1_b2": jnp.zeros((1, n_h), jnp.float32),
        "d1_w3": jax.random.normal(ks[5], (n_h, n_in), jnp.float32) * s,
        "d1_b3": jnp.zeros((1, n_in), jnp.float32),
        # feature2_decoder: FNN(n_h, n_h, n_in, 3)
        "d2_w1": jax.random.normal(ks[6], (n_h, n_h), jnp.float32) * s,
        "d2_b1": jnp.zeros((1, n_h), jnp.float32),
        "d2_w2": jax.random.normal(ks[7], (n_h, n_h), jnp.float32) * s,
        "d2_b2": jnp.zeros((1, n_h), jnp.float32),
        "d2_w3": jax.random.normal(ks[8], (n_h, n_in), jnp.float32) * s,
        "d2_b3": jnp.zeros((1, n_in), jnp.float32),
    }


if __name__ == "__main__":
    B, N, n_in, n_h = 1, 8, 16, 32

    key = jax.random.PRNGKey(0)
    k1, k2, k3, k4 = jax.random.split(key, 4)

    seq1 = jax.random.normal(k1, (B, N, n_in), jnp.float32)

    # symmetric, row-normalized adjacency with self-loops
    a = jax.random.uniform(k2, (N, N), jnp.float32)
    adj = (a + a.T) * 0.5 + jnp.eye(N, dtype=jnp.float32)
    adj = adj / jnp.sum(adj, axis=1, keepdims=True)

    subgraph = (jax.random.uniform(k3, (N, 1)) > 0.5).astype(jnp.float32)
    subgraph = subgraph.at[0, 0].set(1.0)   # ensure non-empty
    subgraph2 = (jax.random.uniform(k4, (N, 1)) > 0.5).astype(jnp.float32)
    subgraph2 = subgraph2.at[1, 0].set(1.0)

    msk = jnp.ones((N, 1), jnp.float32)     # only feeds the (dead) reference readout

    params = init_params(jax.random.PRNGKey(42), n_in, n_h)
    prepped = prepare_params(params)

    ret, feat_loss = dgi_forward(prepped, seq1, subgraph, subgraph2, adj, msk)
    jax.block_until_ready((ret, feat_loss))

    assert ret.shape == (1, 2 * N)
    assert feat_loss.shape == ()
    assert bool(jnp.isfinite(feat_loss)) and bool(jnp.all(jnp.isfinite(ret)))
    print("KERNEL_OK")
</pallas_src>

<mosaic_0001>
module attributes {stable_mosaic.version = 11 : i64} {
  func.func @dgi_fused_kernel(%arg0: i32, %arg1: memref<8x128xf32, #tpu.memory_space<vmem>>, %arg2: memref<8x1xf32, #tpu.memory_space<vmem>>, %arg3: memref<8x1xf32, #tpu.memory_space<vmem>>, %arg4: memref<8x8xbf16, #tpu.memory_space<vmem>>, %arg5: memref<128x128xbf16, #tpu.memory_space<vmem>>, %arg6: memref<1x128xf32, #tpu.memory_space<vmem>>, %arg7: memref<128x128xbf16, #tpu.memory_space<vmem>>, %arg8: memref<1x128xf32, #tpu.memory_space<vmem>>, %arg9: memref<128x128xbf16, #tpu.memory_space<vmem>>, %arg10: memref<1x1xf32, #tpu.memory_space<vmem>>, %arg11: memref<128x128xbf16, #tpu.memory_space<vmem>>, %arg12: memref<1x128xf32, #tpu.memory_space<vmem>>, %arg13: memref<128x128xbf16, #tpu.memory_space<vmem>>, %arg14: memref<1x128xf32, #tpu.memory_space<vmem>>, %arg15: memref<128x128xbf16, #tpu.memory_space<vmem>>, %arg16: memref<1x128xf32, #tpu.memory_space<vmem>>, %arg17: memref<128x128xbf16, #tpu.memory_space<vmem>>, %arg18: memref<1x128xf32, #tpu.memory_space<vmem>>, %arg19: memref<128x128xbf16, #tpu.memory_space<vmem>>, %arg20: memref<1x128xf32, #tpu.memory_space<vmem>>, %arg21: memref<128x128xbf16, #tpu.memory_space<vmem>>, %arg22: memref<1x128xf32, #tpu.memory_space<vmem>>, %arg23: memref<1x16xf32, #tpu.memory_space<vmem>>, %arg24: memref<1x1xf32, #tpu.memory_space<vmem>>) attributes {dimension_semantics = [#tpu.dimension_semantics<arbitrary>], iteration_bounds = array<i64: 1>, scalar_prefetch = 0 : i64, scratch_operands = 0 : i64, tpu.core_type = #tpu.core_type<tc>, window_params = [{pipeline_mode = #tpu.pipeline_mode<synchronous>, transform_indices = @transform_0, window_bounds = array<i64: 8, 128>}, {pipeline_mode = #tpu.pipeline_mode<synchronous>, transform_indices = @transform_1, window_bounds = array<i64: 8, 1>}, {pipeline_mode = #tpu.pipeline_mode<synchronous>, transform_indices = @transform_2, window_bounds = array<i64: 8, 1>}, {pipeline_mode = #tpu.pipeline_mode<synchronous>, transform_indices = @transform_3, window_bounds = array<i64: 8, 8>}, {pipeline_mode = #tpu.pipeline_mode<synchronous>, transform_indices = @transform_4, window_bounds = array<i64: 128, 128>}, {pipeline_mode = #tpu.pipeline_mode<synchronous>, transform_indices = @transform_5, window_bounds = array<i64: 1, 128>}, {pipeline_mode = #tpu.pipeline_mode<synchronous>, transform_indices = @transform_6, window_bounds = array<i64: 128, 128>}, {pipeline_mode = #tpu.pipeline_mode<synchronous>, transform_indices = @transform_7, window_bounds = array<i64: 1, 128>}, {pipeline_mode = #tpu.pipeline_mode<synchronous>, transform_indices = @transform_8, window_bounds = array<i64: 128, 128>}, {pipeline_mode = #tpu.pipeline_mode<synchronous>, transform_indices = @transform_9, window_bounds = array<i64: 1, 1>}, {pipeline_mode = #tpu.pipeline_mode<synchronous>, transform_indices = @transform_10, window_bounds = array<i64: 128, 128>}, {pipeline_mode = #tpu.pipeline_mode<synchronous>, transform_indices = @transform_11, window_bounds = array<i64: 1, 128>}, {pipeline_mode = #tpu.pipeline_mode<synchronous>, transform_indices = @transform_12, window_bounds = array<i64: 128, 128>}, {pipeline_mode = #tpu.pipeline_mode<synchronous>, transform_indices = @transform_13, window_bounds = array<i64: 1, 128>}, {pipeline_mode = #tpu.pipeline_mode<synchronous>, transform_indices = @transform_14, window_bounds = array<i64: 128, 128>}, {pipeline_mode = #tpu.pipeline_mode<synchronous>, transform_indices = @transform_15, window_bounds = array<i64: 1, 128>}, {pipeline_mode = #tpu.pipeline_mode<synchronous>, transform_indices = @transform_16, window_bounds = array<i64: 128, 128>}, {pipeline_mode = #tpu.pipeline_mode<synchronous>, transform_indices = @transform_17, window_bounds = array<i64: 1, 128>}, {pipeline_mode = #tpu.pipeline_mode<synchronous>, transform_indices = @transform_18, window_bounds = array<i64: 128, 128>}, {pipeline_mode = #tpu.pipeline_mode<synchronous>, transform_indices = @transform_19, window_bounds = array<i64: 1, 128>}, {pipeline_mode = #tpu.pipeline_mode<synchronous>, transform_indices = @transform_20, window_bounds = array<i64: 128, 128>}, {pipeline_mode = #tpu.pipeline_mode<synchronous>, transform_indices = @transform_21, window_bounds = array<i64: 1, 128>}, {pipeline_mode = #tpu.pipeline_mode<synchronous>, transform_indices = @transform_22, window_bounds = array<i64: 1, 16>}, {pipeline_mode = #tpu.pipeline_mode<synchronous>, transform_indices = @transform_23, window_bounds = array<i64: 1, 1>}]} {
    %c0 = arith.constant 0 : index
    %c0_0 = arith.constant 0 : index
    %0 = vector.load %arg1[%c0, %c0_0] : memref<8x128xf32, #tpu.memory_space<vmem>>, vector<8x128xf32>
    %c0_1 = arith.constant 0 : index
    %c0_2 = arith.constant 0 : index
    %1 = vector.load %arg2[%c0_1, %c0_2] : memref<8x1xf32, #tpu.memory_space<vmem>>, vector<8x1xf32>
    %c0_3 = arith.constant 0 : index
    %c0_4 = arith.constant 0 : index
    %2 = vector.load %arg3[%c0_3, %c0_4] : memref<8x1xf32, #tpu.memory_space<vmem>>, vector<8x1xf32>
    %c0_5 = arith.constant 0 : index
    %c0_6 = arith.constant 0 : index
    %3 = vector.load %arg4[%c0_5, %c0_6] : memref<8x8xbf16, #tpu.memory_space<vmem>>, vector<8x8xbf16>
    %4 = arith.truncf %0 : vector<8x128xf32> to vector<8x128xbf16>
    %c0_7 = arith.constant 0 : index
    %c0_8 = arith.constant 0 : index
    %5 = vector.load %arg5[%c0_7, %c0_8] : memref<128x128xbf16, #tpu.memory_space<vmem>>, vector<128x128xbf16>
    %cst = arith.constant dense<0.000000e+00> : vector<8x128xf32>
    %6 = tpu.matmul %4, %5, %cst {dimension_numbers = #tpu.dot_dimension_numbers<[1], [0], [0], [1], [0, 0, 1, 1], [], []>} : vector<8x128xbf16>, vector<128x128xbf16>, vector<8x128xf32> -> vector<8x128xf32>
    %7 = vector.broadcast %1 : vector<8x1xf32> to vector<8x128xf32>
    %8 = arith.mulf %6, %7 : vector<8x128xf32>
    %9 = arith.truncf %8 : vector<8x128xf32> to vector<8x128xbf16>
    %cst_9 = arith.constant dense<0.000000e+00> : vector<8x128xf32>
    %10 = tpu.matmul %3, %9, %cst_9 {dimension_numbers = #tpu.dot_dimension_numbers<[1], [0], [0], [1], [0, 0, 1, 1], [], []>} : vector<8x8xbf16>, vector<8x128xbf16>, vector<8x128xf32> -> vector<8x128xf32>
    %c0_10 = arith.constant 0 : index
    %c0_11 = arith.constant 0 : index
    %11 = vector.load %arg6[%c0_10, %c0_11] : memref<1x128xf32, #tpu.memory_space<vmem>>, vector<1x128xf32>
    %12 = vector.broadcast %11 : vector<1x128xf32> to vector<8x128xf32>
    %13 = arith.addf %10, %12 : vector<8x128xf32>
    %cst_12 = arith.constant 0.000000e+00 : f32
    %14 = vector.broadcast %cst_12 : f32 to vector<8x128xf32>
    %15 = arith.maximumf %13, %14 : vector<8x128xf32>
    %16 = vector.broadcast %2 : vector<8x1xf32> to vector<8x128xf32>
    %17 = arith.mulf %6, %16 : vector<8x128xf32>
    %18 = arith.truncf %17 : vector<8x128xf32> to vector<8x128xbf16>
    %cst_13 = arith.constant dense<0.000000e+00> : vector<8x128xf32>
    %19 = tpu.matmul %3, %18, %cst_13 {dimension_numbers = #tpu.dot_dimension_numbers<[1], [0], [0], [1], [0, 0, 1, 1], [], []>} : vector<8x8xbf16>, vector<8x128xbf16>, vector<8x128xf32> -> vector<8x128xf32>
    %c0_14 = arith.constant 0 : index
    %c0_15 = arith.constant 0 : index
    %20 = vector.load %arg6[%c0_14, %c0_15] : memref<1x128xf32, #tpu.memory_space<vmem>>, vector<1x128xf32>
    %21 = vector.broadcast %20 : vector<1x128xf32> to vector<8x128xf32>
    %22 = arith.addf %19, %21 : vector<8x128xf32>
    %cst_16 = arith.constant 0.000000e+00 : f32
    %23 = vector.broadcast %cst_16 : f32 to vector<8x128xf32>
    %24 = arith.maximumf %22, %23 : vector<8x128xf32>
    %25 = vector.broadcast %1 : vector<8x1xf32> to vector<8x128xf32>
    %26 = arith.mulf %15, %25 : vector<8x128xf32>
    %27 = arith.truncf %26 : vector<8x128xf32> to vector<8x128xbf16>
    %c0_17 = arith.constant 0 : index
    %c0_18 = arith.constant 0 : index
    %28 = vector.load %arg7[%c0_17, %c0_18] : memref<128x128xbf16, #tpu.memory_space<vmem>>, vector<128x128xbf16>
    %cst_19 = arith.constant dense<0.000000e+00> : vector<8x128xf32>
    %29 = tpu.matmul %27, %28, %cst_19 {dimension_numbers = #tpu.dot_dimension_numbers<[1], [0], [0], [1], [0, 0, 1, 1], [], []>} : vector<8x128xbf16>, vector<128x128xbf16>, vector<8x128xf32> -> vector<8x128xf32>
    %30 = arith.truncf %29 : vector<8x128xf32> to vector<8x128xbf16>
    %cst_20 = arith.constant dense<0.000000e+00> : vector<8x128xf32>
    %31 = tpu.matmul %3, %30, %cst_20 {dimension_numbers = #tpu.dot_dimension_numbers<[1], [0], [0], [1], [0, 0, 1, 1], [], []>} : vector<8x8xbf16>, vector<8x128xbf16>, vector<8x128xf32> -> vector<8x128xf32>
    %c0_21 = arith.constant 0 : index
    %c0_22 = arith.constant 0 : index
    %32 = vector.load %arg8[%c0_21, %c0_22] : memref<1x128xf32, #tpu.memory_space<vmem>>, vector<1x128xf32>
    %33 = vector.broadcast %32 : vector<1x128xf32> to vector<8x128xf32>
    %34 = arith.addf %31, %33 : vector<8x128xf32>
    %cst_23 = arith.constant 0.000000e+00 : f32
    %35 = vector.broadcast %cst_23 : f32 to vector<8x128xf32>
    %36 = arith.maximumf %34, %35 : vector<8x128xf32>
    %37 = vector.broadcast %1 : vector<8x1xf32> to vector<8x128xf32>
    %38 = arith.mulf %36, %37 : vector<8x128xf32>
    %cst_24 = arith.constant dense<0.000000e+00> : vector<128xf32>
    %39 = vector.multi_reduction <add>, %38, %cst_24 [0] : vector<8x128xf32> to vector<128xf32>
    %40 = vector.shape_cast %39 : vector<128xf32> to vector<1x128xf32>
    %cst_25 = arith.constant dense<0.000000e+00> : vector<1xf32>
    %41 = vector.multi_reduction <add>, %1, %cst_25 [0] : vector<8x1xf32> to vector<1xf32>
    %42 = vector.shape_cast %41 : vector<1xf32> to vector<1x1xf32>
    %cst_26 = arith.constant 9.99999996E-13 : f32
    %43 = vector.broadcast %cst_26 : f32 to vector<1x1xf32>
    %44 = arith.maximumf %42, %43 : vector<1x1xf32>
    %45 = tpu.reciprocal %44 {approx = true} : vector<1x1xf32> -> vector<1x1xf32>
    %46 = vector.broadcast %45 : vector<1x1xf32> to vector<1x128xf32>
    %47 = arith.mulf %40, %46 : vector<1x128xf32>
    %48 = arith.negf %47 : vector<1x128xf32>
    %49 = math.exp %48 : vector<1x128xf32>
    %cst_27 = arith.constant 1.000000e+00 : f32
    %50 = vector.broadcast %cst_27 : f32 to vector<1x128xf32>
    %51 = arith.addf %50, %49 : vector<1x128xf32>
    %52 = arith.divf %50, %51 : vector<1x128xf32>
    %53 = arith.truncf %52 : vector<1x128xf32> to vector<1x128xbf16>
    %c0_28 = arith.constant 0 : index
    %c0_29 = arith.constant 0 : index
    %54 = vector.load %arg9[%c0_28, %c0_29] : memref<128x128xbf16, #tpu.memory_space<vmem>>, vector<128x128xbf16>
    %cst_30 = arith.constant dense<0.000000e+00> : vector<1x128xf32>
    %55 = tpu.matmul %53, %54, %cst_30 {dimension_numbers = #tpu.dot_dimension_numbers<[1], [0], [0], [1], [0, 0, 1, 1], [], []>} : vector<1x128xbf16>, vector<128x128xbf16>, vector<1x128xf32> -> vector<1x128xf32>
    %56 = arith.truncf %55 : vector<1x128xf32> to vector<1x128xbf16>
    %57 = arith.truncf %15 : vector<8x128xf32> to vector<8x128xbf16>
    %cst_31 = arith.constant dense<0.000000e+00> : vector<1x8xf32>
    %58 = tpu.matmul %56, %57, %cst_31 {dimension_numbers = #tpu.dot_dimension_numbers<[1], [1], [0], [0], [0, 0, 1, 0], [], []>} : vector<1x128xbf16>, vector<8x128xbf16>, vector<1x8xf32> -> vector<1x8xf32>
    %59 = arith.truncf %24 : vector<8x128xf32> to vector<8x128xbf16>
    %cst_32 = arith.constant dense<0.000000e+00> : vector<1x8xf32>
    %60 = tpu.matmul %56, %59, %cst_32 {dimension_numbers = #tpu.dot_dimension_numbers<[1], [1], [0], [0], [0, 0, 1, 0], [], []>} : vector<1x128xbf16>, vector<8x128xbf16>, vector<1x8xf32> -> vector<1x8xf32>
    %c0_33 = arith.constant 0 : index
    %c0_34 = arith.constant 0 : index
    %61 = vector.load %arg10[%c0_33, %c0_34] : memref<1x1xf32, #tpu.memory_space<vmem>>, vector<1x1xf32>
    %62 = vector.broadcast %61 : vector<1x1xf32> to vector<1x8xf32>
    %63 = arith.addf %58, %62 : vector<1x8xf32>
    %c0_35 = arith.constant 0 : index
    %c0_36 = arith.constant 0 : index
    %64 = vector.load %arg23[%c0_35, %c0_36] : memref<1x16xf32, #tpu.memory_space<vmem>>, vector<1x8xf32>
    tpu.vector_store %arg23[%c0_35, %c0_36], %63 {strides = array<i32>} : memref<1x16xf32, #tpu.memory_space<vmem>>, vector<1x8xf32>,
    %65 = vector.broadcast %61 : vector<1x1xf32> to vector<1x8xf32>
    %66 = arith.addf %60, %65 : vector<1x8xf32>
    %c0_37 = arith.constant 0 : index
    %c8 = arith.constant 8 : index
    %67 = vector.load %arg23[%c0_37, %c8] : memref<1x16xf32, #tpu.memory_space<vmem>>, vector<1x8xf32>
    tpu.vector_store %arg23[%c0_37, %c8], %66 {strides = array<i32>} : memref<1x16xf32, #tpu.memory_space<vmem>>, vector<1x8xf32>,
    %c0_38 = arith.constant 0 : index
    %c0_39 = arith.constant 0 : index
    %68 = vector.load %arg11[%c0_38, %c0_39] : memref<128x128xbf16, #tpu.memory_space<vmem>>, vector<128x128xbf16>
    %c0_40 = arith.constant 0 : index
    %c0_41 = arith.constant 0 : index
    %69 = vector.load %arg12[%c0_40, %c0_41] : memref<1x128xf32, #tpu.memory_space<vmem>>, vector<1x128xf32>
    %c0_42 = arith.constant 0 : index
    %c0_43 = arith.constant 0 : index
    %70 = vector.load %arg13[%c0_42, %c0_43] : memref<128x128xbf16, #tpu.memory_space<vmem>>, vector<128x128xbf16>
    %c0_44 = arith.constant 0 : index
    %c0_45 = arith.constant 0 : index
    %71 = vector.load %arg14[%c0_44, %c0_45] : memref<1x128xf32, #tpu.memory_space<vmem>>, vector<1x128xf32>
    %c0_46 = arith.constant 0 : index
    %c0_47 = arith.constant 0 : index
    %72 = vector.load %arg15[%c0_46, %c0_47] : memref<128x128xbf16, #tpu.memory_space<vmem>>, vector<128x128xbf16>
    %c0_48 = arith.constant 0 : index
    %c0_49 = arith.constant 0 : index
    %73 = vector.load %arg16[%c0_48, %c0_49] : memref<1x128xf32, #tpu.memory_space<vmem>>, vector<1x128xf32>
    %74 = arith.truncf %15 : vector<8x128xf32> to vector<8x128xbf16>
    %cst_50 = arith.constant dense<0.000000e+00> : vector<8x128xf32>
    %75 = tpu.matmul %74, %68, %cst_50 {dimension_numbers = #tpu.dot_dimension_numbers<[1], [0], [0], [1], [0, 0, 1, 1], [], []>} : vector<8x128xbf16>, vector<128x128xbf16>, vector<8x128xf32> -> vector<8x128xf32>
    %76 = vector.broadcast %69 : vector<1x128xf32> to vector<8x128xf32>
    %77 = arith.addf %75, %76 : vector<8x128xf32>
    %cst_51 = arith.constant 0.000000e+00 : f32
    %78 = vector.broadcast %cst_51 : f32 to vector<8x128xf32>
    %79 = arith.maximumf %77, %78 : vector<8x128xf32>
    %80 = arith.truncf %79 : vector<8x128xf32> to vector<8x128xbf16>
    %cst_52 = arith.constant dense<0.000000e+00> : vector<8x128xf32>
    %81 = tpu.matmul %80, %70, %cst_52 {dimension_numbers = #tpu.dot_dimension_numbers<[1], [0], [0], [1], [0, 0, 1, 1], [], []>} : vector<8x128xbf16>, vector<128x128xbf16>, vector<8x128xf32> -> vector<8x128xf32>
    %82 = vector.broadcast %71 : vector<1x128xf32> to vector<8x128xf32>
    %83 = arith.addf %81, %82 : vector<8x128xf32>
    %cst_53 = arith.constant 0.000000e+00 : f32
    %84 = vector.broadcast %cst_53 : f32 to vector<8x128xf32>
    %85 = arith.maximumf %83, %84 : vector<8x128xf32>
    %86 = arith.truncf %85 : vector<8x128xf32> to vector<8x128xbf16>
    %cst_54 = arith.constant dense<0.000000e+00> : vector<8x128xf32>
    %87 = tpu.matmul %86, %72, %cst_54 {dimension_numbers = #tpu.dot_dimension_numbers<[1], [0], [0], [1], [0, 0, 1, 1], [], []>} : vector<8x128xbf16>, vector<128x128xbf16>, vector<8x128xf32> -> vector<8x128xf32>
    %88 = vector.broadcast %73 : vector<1x128xf32> to vector<8x128xf32>
    %89 = arith.addf %87, %88 : vector<8x128xf32>
    %c0_55 = arith.constant 0 : index
    %c0_56 = arith.constant 0 : index
    %90 = vector.load %arg17[%c0_55, %c0_56] : memref<128x128xbf16, #tpu.memory_space<vmem>>, vector<128x128xbf16>
    %c0_57 = arith.constant 0 : index
    %c0_58 = arith.constant 0 : index
    %91 = vector.load %arg18[%c0_57, %c0_58] : memref<1x128xf32, #tpu.memory_space<vmem>>, vector<1x128xf32>
    %c0_59 = arith.constant 0 : index
    %c0_60 = arith.constant 0 : index
    %92 = vector.load %arg19[%c0_59, %c0_60] : memref<128x128xbf16, #tpu.memory_space<vmem>>, vector<128x128xbf16>
    %c0_61 = arith.constant 0 : index
    %c0_62 = arith.constant 0 : index
    %93 = vector.load %arg20[%c0_61, %c0_62] : memref<1x128xf32, #tpu.memory_space<vmem>>, vector<1x128xf32>
    %c0_63 = arith.constant 0 : index
    %c0_64 = arith.constant 0 : index
    %94 = vector.load %arg21[%c0_63, %c0_64] : memref<128x128xbf16, #tpu.memory_space<vmem>>, vector<128x128xbf16>
    %c0_65 = arith.constant 0 : index
    %c0_66 = arith.constant 0 : index
    %95 = vector.load %arg22[%c0_65, %c0_66] : memref<1x128xf32, #tpu.memory_space<vmem>>, vector<1x128xf32>
    %96 = arith.truncf %36 : vector<8x128xf32> to vector<8x128xbf16>
    %cst_67 = arith.constant dense<0.000000e+00> : vector<8x128xf32>
    %97 = tpu.matmul %96, %90, %cst_67 {dimension_numbers = #tpu.dot_dimension_numbers<[1], [0], [0], [1], [0, 0, 1, 1], [], []>} : vector<8x128xbf16>, vector<128x128xbf16>, vector<8x128xf32> -> vector<8x128xf32>
    %98 = vector.broadcast %91 : vector<1x128xf32> to vector<8x128xf32>
    %99 = arith.addf %97, %98 : vector<8x128xf32>
    %cst_68 = arith.constant 0.000000e+00 : f32
    %100 = vector.broadcast %cst_68 : f32 to vector<8x128xf32>
    %101 = arith.maximumf %99, %100 : vector<8x128xf32>
    %102 = arith.truncf %101 : vector<8x128xf32> to vector<8x128xbf16>
    %cst_69 = arith.constant dense<0.000000e+00> : vector<8x128xf32>
    %103 = tpu.matmul %102, %92, %cst_69 {dimension_numbers = #tpu.dot_dimension_numbers<[1], [0], [0], [1], [0, 0, 1, 1], [], []>} : vector<8x128xbf16>, vector<128x128xbf16>, vector<8x128xf32> -> vector<8x128xf32>
    %104 = vector.broadcast %93 : vector<1x128xf32> to vector<8x128xf32>
    %105 = arith.addf %103, %104 : vector<8x128xf32>
    %cst_70 = arith.constant 0.000000e+00 : f32
    %106 = vector.broadcast %cst_70 : f32 to vector<8x128xf32>
    %107 = arith.maximumf %105, %106 : vector<8x128xf32>
    %108 = arith.truncf %107 : vector<8x128xf32> to vector<8x128xbf16>
    %cst_71 = arith.constant dense<0.000000e+00> : vector<8x128xf32>
    %109 = tpu.matmul %108, %94, %cst_71 {dimension_numbers = #tpu.dot_dimension_numbers<[1], [0], [0], [1], [0, 0, 1, 1], [], []>} : vector<8x128xbf16>, vector<128x128xbf16>, vector<8x128xf32> -> vector<8x128xf32>
    %110 = vector.broadcast %95 : vector<1x128xf32> to vector<8x128xf32>
    %111 = arith.addf %109, %110 : vector<8x128xf32>
    %112 = arith.subf %89, %0 : vector<8x128xf32>
    %113 = arith.subf %111, %0 : vector<8x128xf32>
    %114 = arith.mulf %112, %112 : vector<8x128xf32>
    %115 = vector.shape_cast %114 : vector<8x128xf32> to vector<1x8x128xf32>
    %cst_72 = arith.constant dense<0.000000e+00> : vector<1xf32>
    %116 = vector.multi_reduction <add>, %115, %cst_72 [1, 2] : vector<1x8x128xf32> to vector<1xf32>
    %117 = vector.shape_cast %116 : vector<1xf32> to vector<1x1x1xf32>
    %118 = vector.extract %117[0, 0, 0] : f32 from vector<1x1x1xf32>
    %119 = arith.mulf %113, %113 : vector<8x128xf32>
    %120 = vector.shape_cast %119 : vector<8x128xf32> to vector<1x8x128xf32>
    %cst_73 = arith.constant dense<0.000000e+00> : vector<1xf32>
    %121 = vector.multi_reduction <add>, %120, %cst_73 [1, 2] : vector<1x8x128xf32> to vector<1xf32>
    %122 = vector.shape_cast %121 : vector<1xf32> to vector<1x1x1xf32>
    %123 = vector.extract %122[0, 0, 0] : f32 from vector<1x1x1xf32>
    %124 = arith.addf %118, %123 : f32
    %cst_74 = arith.constant 7.812500e-03 : f32
    %125 = arith.mulf %124, %cst_74 : f32
    %126 = vector.broadcast %125 : f32 to vector<1x1xf32>
    %c0_75 = arith.constant 0 : index
    %c0_76 = arith.constant 0 : index
    %127 = vector.load %arg24[%c0_75, %c0_76] : memref<1x1xf32, #tpu.memory_space<vmem>>, vector<1x1xf32>
    tpu.vector_store %arg24[%c0_75, %c0_76], %126 {strides = array<i32>} : memref<1x1xf32, #tpu.memory_space<vmem>>, vector<1x1xf32>,
    return
  }
  func.func @transform_0(%arg0: i32) -> (i32, i32) {
    %c0_i32 = arith.constant 0 : i32
    %c0_i32_0 = arith.constant 0 : i32
    %c0_i32_1 = arith.constant 0 : i32
    return %c0_i32, %c0_i32_0 : i32, i32
  }
  func.func @transform_1(%arg0: i32) -> (i32, i32) {
    %c0_i32 = arith.constant 0 : i32
    %c0_i32_0 = arith.constant 0 : i32
    %c0_i32_1 = arith.constant 0 : i32
    return %c0_i32, %c0_i32_0 : i32, i32
  }
  func.func @transform_2(%arg0: i32) -> (i32, i32) {
    %c0_i32 = arith.constant 0 : i32
    %c0_i32_0 = arith.constant 0 : i32
    %c0_i32_1 = arith.constant 0 : i32
    return %c0_i32, %c0_i32_0 : i32, i32
  }
  func.func @transform_3(%arg0: i32) -> (i32, i32) {
    %c0_i32 = arith.constant 0 : i32
    %c0_i32_0 = arith.constant 0 : i32
    %c0_i32_1 = arith.constant 0 : i32
    return %c0_i32, %c0_i32_0 : i32, i32
  }
  func.func @transform_4(%arg0: i32) -> (i32, i32) {
    %c0_i32 = arith.constant 0 : i32
    %c0_i32_0 = arith.constant 0 : i32
    %c0_i32_1 = arith.constant 0 : i32
    return %c0_i32, %c0_i32_0 : i32, i32
  }
  func.func @transform_5(%arg0: i32) -> (i32, i32) {
    %c0_i32 = arith.constant 0 : i32
    %c0_i32_0 = arith.constant 0 : i32
    %c0_i32_1 = arith.constant 0 : i32
    return %c0_i32, %c0_i32_0 : i32, i32
  }
  func.func @transform_6(%arg0: i32) -> (i32, i32) {
    %c0_i32 = arith.constant 0 : i32
    %c0_i32_0 = arith.constant 0 : i32
    %c0_i32_1 = arith.constant 0 : i32
    return %c0_i32, %c0_i32_0 : i32, i32
  }
  func.func @transform_7(%arg0: i32) -> (i32, i32) {
    %c0_i32 = arith.constant 0 : i32
    %c0_i32_0 = arith.constant 0 : i32
    %c0_i32_1 = arith.constant 0 : i32
    return %c0_i32, %c0_i32_0 : i32, i32
  }
  func.func @transform_8(%arg0: i32) -> (i32, i32) {
    %c0_i32 = arith.constant 0 : i32
    %c0_i32_0 = arith.constant 0 : i32
    %c0_i32_1 = arith.constant 0 : i32
    return %c0_i32, %c0_i32_0 : i32, i32
  }
  func.func @transform_9(%arg0: i32) -> (i32, i32) {
    %c0_i32 = arith.constant 0 : i32
    %c0_i32_0 = arith.constant 0 : i32
    %c0_i32_1 = arith.constant 0 : i32
    return %c0_i32, %c0_i32_0 : i32, i32
  }
  func.func @transform_10(%arg0: i32) -> (i32, i32) {
    %c0_i32 = arith.constant 0 : i32
    %c0_i32_0 = arith.constant 0 : i32
    %c0_i32_1 = arith.constant 0 : i32
    return %c0_i32, %c0_i32_0 : i32, i32
  }
  func.func @transform_11(%arg0: i32) -> (i32, i32) {
    %c0_i32 = arith.constant 0 : i32
    %c0_i32_0 = arith.constant 0 : i32
    %c0_i32_1 = arith.constant 0 : i32
    return %c0_i32, %c0_i32_0 : i32, i32
  }
  func.func @transform_12(%arg0: i32) -> (i32, i32) {
    %c0_i32 = arith.constant 0 : i32
    %c0_i32_0 = arith.constant 0 : i32
    %c0_i32_1 = arith.constant 0 : i32
    return %c0_i32, %c0_i32_0 : i32, i32
  }
  func.func @transform_13(%arg0: i32) -> (i32, i32) {
    %c0_i32 = arith.constant 0 : i32
    %c0_i32_0 = arith.constant 0 : i32
    %c0_i32_1 = arith.constant 0 : i32
    return %c0_i32, %c0_i32_0 : i32, i32
  }
  func.func @transform_14(%arg0: i32) -> (i32, i32) {
    %c0_i32 = arith.constant 0 : i32
    %c0_i32_0 = arith.constant 0 : i32
    %c0_i32_1 = arith.constant 0 : i32
    return %c0_i32, %c0_i32_0 : i32, i32
  }
  func.func @transform_15(%arg0: i32) -> (i32, i32) {
    %c0_i32 = arith.constant 0 : i32
    %c0_i32_0 = arith.constant 0 : i32
    %c0_i32_1 = arith.constant 0 : i32
    return %c0_i32, %c0_i32_0 : i32, i32
  }
  func.func @transform_16(%arg0: i32) -> (i32, i32) {
    %c0_i32 = arith.constant 0 : i32
    %c0_i32_0 = arith.constant 0 : i32
    %c0_i32_1 = arith.constant 0 : i32
    return %c0_i32, %c0_i32_0 : i32, i32
  }
  func.func @transform_17(%arg0: i32) -> (i32, i32) {
    %c0_i32 = arith.constant 0 : i32
    %c0_i32_0 = arith.constant 0 : i32
    %c0_i32_1 = arith.constant 0 : i32
    return %c0_i32, %c0_i32_0 : i32, i32
  }
  func.func @transform_18(%arg0: i32) -> (i32, i32) {
    %c0_i32 = arith.constant 0 : i32
    %c0_i32_0 = arith.constant 0 : i32
    %c0_i32_1 = arith.constant 0 : i32
    return %c0_i32, %c0_i32_0 : i32, i32
  }
  func.func @transform_19(%arg0: i32) -> (i32, i32) {
    %c0_i32 = arith.constant 0 : i32
    %c0_i32_0 = arith.constant 0 : i32
    %c0_i32_1 = arith.constant 0 : i32
    return %c0_i32, %c0_i32_0 : i32, i32
  }
  func.func @transform_20(%arg0: i32) -> (i32, i32) {
    %c0_i32 = arith.constant 0 : i32
    %c0_i32_0 = arith.constant 0 : i32
    %c0_i32_1 = arith.constant 0 : i32
    return %c0_i32, %c0_i32_0 : i32, i32
  }
  func.func @transform_21(%arg0: i32) -> (i32, i32) {
    %c0_i32 = arith.constant 0 : i32
    %c0_i32_0 = arith.constant 0 : i32
    %c0_i32_1 = arith.constant 0 : i32
    return %c0_i32, %c0_i32_0 : i32, i32
  }
  func.func @transform_22(%arg0: i32) -> (i32, i32) {
    %c0_i32 = arith.constant 0 : i32
    %c0_i32_0 = arith.constant 0 : i32
    %c0_i32_1 = arith.constant 0 : i32
    return %c0_i32, %c0_i32_0 : i32, i32
  }
  func.func @transform_23(%arg0: i32) -> (i32, i32) {
    %c0_i32 = arith.constant 0 : i32
    %c0_i32_0 = arith.constant 0 : i32
    %c0_i32_1 = arith.constant 0 : i32
    return %c0_i32, %c0_i32_0 : i32, i32
  }
}

</mosaic_0001>

<llo_original>
// kernel: tpu_custom_call.1
$region0: #{tpu_custom_call.1}
  #allocation0 [shape = 'u32[]', space=smem, size = 0x4, offset = 0x4, fixed_abs, tag = 'smem constant byte address 0x4 - core index']
  #allocation1 [shape = 'u32[144,128]{1,0:T(1,128)}', space=vmem, size = 0x12000, scoped, tag = 'internal scratch']
  #allocation2 [shape = 'f32[1,1]{1,0:T(1,128)S(1)}', space=vmem, size = 0x200, scoped, tag = 'scoped memory for tpu_custom_call.1']
  %s0 = inlined_call_operand.hbm [shape: f32[8,128], index: 0, kind: input, shape index: {}]
  %s1 = inlined_call_operand.vmem [shape: f32[8,1], index: 1, kind: input, shape index: {}]
  %s2 = inlined_call_operand.vmem [shape: f32[8,1], index: 2, kind: input, shape index: {}]
  %s3 = inlined_call_operand.vmem [shape: bf16[8,8], index: 3, kind: input, shape index: {}]
  %s4 = inlined_call_operand.hbm [shape: bf16[128,128], index: 4, kind: input, shape index: {}]
  %s5 = inlined_call_operand.vmem [shape: f32[1,128], index: 5, kind: input, shape index: {}]
  %s6 = inlined_call_operand.hbm [shape: bf16[128,128], index: 6, kind: input, shape index: {}]
  %s7 = inlined_call_operand.vmem [shape: f32[1,128], index: 7, kind: input, shape index: {}]
  %s8 = inlined_call_operand.hbm [shape: bf16[128,128], index: 8, kind: input, shape index: {}]
  %s9 = inlined_call_operand.<no memory space> [shape: f32[1,1], index: 9, kind: input, shape index: {}]
  %s10 = inlined_call_operand.hbm [shape: bf16[128,128], index: 10, kind: input, shape index: {}]
  %s11 = inlined_call_operand.vmem [shape: f32[1,128], index: 11, kind: input, shape index: {}]
  %s12 = inlined_call_operand.hbm [shape: bf16[128,128], index: 12, kind: input, shape index: {}]
  %s13 = inlined_call_operand.hbm [shape: f32[1,128], index: 13, kind: input, shape index: {}]
  %s14 = inlined_call_operand.vmem [shape: bf16[128,128], index: 14, kind: input, shape index: {}]
  %s15 = inlined_call_operand.vmem [shape: f32[1,128], index: 15, kind: input, shape index: {}]
  %s16 = inlined_call_operand.hbm [shape: bf16[128,128], index: 16, kind: input, shape index: {}]
  %s17 = inlined_call_operand.vmem [shape: f32[1,128], index: 17, kind: input, shape index: {}]
  %s18 = inlined_call_operand.hbm [shape: bf16[128,128], index: 18, kind: input, shape index: {}]
  %s19 = inlined_call_operand.vmem [shape: f32[1,128], index: 19, kind: input, shape index: {}]
  %s20 = inlined_call_operand.hbm [shape: bf16[128,128], index: 20, kind: input, shape index: {}]
  %s21 = inlined_call_operand.vmem [shape: f32[1,128], index: 21, kind: input, shape index: {}]
  %s22 = inlined_call_operand.hbm [shape: f32[1,16], index: 22, kind: output, shape index: {0}]
  %s23 = inlined_call_operand.hbm [shape: f32[1,1], index: 23, kind: output, shape index: {1}]
  %24 = xla_tuple %s22, %s23
  %s25 = sld [smem:[#allocation0]]
  $region146: #{tpu_custom_call.1} parent=0
    _
  %s27 = ssub.s32 1, %s25
  %s28 = scalar_select 0, %s27, %s25
  %v29 = vstv %s9
  %30 = vst [vmem:[#allocation2] sm:$0x1] %v29
  $region1: #{tpu_custom_call.1} parent=0
    #allocation3 [shape = 'u8[4096]{0}', space=vmem, size = 0x1000, scoped, tag = 'input window, operand 0, single buffered']
    #allocation4 [shape = 's32[1]{0}', space=sflag, size = 0x4, scoped, tag = 'scoped memory for tpu_custom_call.1']
    #allocation5 [shape = 's32[1]{0}', space=sflag, size = 0x4, scoped, tag = 'scoped memory for tpu_custom_call.1']
    #allocation6 [shape = 'u8[32768]{0}', space=vmem, size = 0x8000, scoped, tag = 'input window, operand 4, single buffered']
    #allocation7 [shape = 's32[1]{0}', space=sflag, size = 0x4, scoped, tag = 'scoped memory for tpu_custom_call.1']
    #allocation8 [shape = 'u8[32768]{0}', space=vmem, size = 0x8000, scoped, tag = 'input window, operand 6, single buffered']
    #allocation9 [shape = 'u8[32768]{0}', space=vmem, size = 0x8000, scoped, tag = 'input window, operand 8, single buffered']
    #allocation10 [shape = 's32[1]{0}', space=sflag, size = 0x4, scoped, tag = 'scoped memory for tpu_custom_call.1']
    #allocation11 [shape = 'u8[32768]{0}', space=vmem, size = 0x8000, scoped, tag = 'input window, operand 10, single buffered']
    #allocation12 [shape = 'u8[32768]{0}', space=vmem, size = 0x8000, scoped, tag = 'input window, operand 12, single buffered']
    #allocation13 [shape = 's32[1]{0}', space=sflag, size = 0x4, scoped, tag = 'scoped memory for tpu_custom_call.1']
    #allocation14 [shape = 'u8[512]{0}', space=vmem, size = 0x400, scoped, tag = 'input window, operand 13, single buffered']
    #allocation15 [shape = 'u8[32768]{0}', space=vmem, size = 0x8000, scoped, tag = 'input window, operand 16, single buffered']
    #allocation16 [shape = 's32[1]{0}', space=sflag, size = 0x4, scoped, tag = 'scoped memory for tpu_custom_call.1']
    #allocation17 [shape = 'u8[32768]{0}', space=vmem, size = 0x8000, scoped, tag = 'input window, operand 18, single buffered']
    #allocation18 [shape = 'u8[32768]{0}', space=vmem, size = 0x8000, scoped, tag = 'input window, operand 20, single buffered']
    #allocation19 [shape = 's32[1]{0}', space=sflag, size = 0x4, scoped, tag = 'scoped memory for tpu_custom_call.1']
    #allocation20 [shape = 'u8[512]{0}', space=vmem, size = 0x400, scoped, tag = 'output window, operand 0, single buffered']
    #allocation21 [shape = 'u8[512]{0}', space=vmem, size = 0x400, scoped, tag = 'output window, operand 1, single buffered']
    #allocation22 [shape = 's32[1]{0}', space=sflag, size = 0x4, scoped, tag = 'scoped memory for tpu_custom_call.1']
    %31 = vsyncpa [#allocation4], 0
    %32 = vsyncpa [#allocation7], 0
    %33 = vsyncpa [#allocation10], 0
    %34 = vsyncpa [#allocation13], 0
    %35 = vsyncpa [#allocation16], 0
    %36 = vsyncpa [#allocation19], 0
    %37 = vsyncpa [#allocation5], 0
    %38 = vsyncpa [#allocation22], 0
    // Predicated region
    $region2: #{tpu_custom_call.1} parent=1 // pred_check
      _
    $region3: #{tpu_custom_call.1} parent=1 // pred_check_branch
      %40 = sbr.rel (0) target = $region5
    $region4: #{tpu_custom_call.1} parent=1 // pred_region
      %s42 = ssub.s32 128, 128
      %43 = vsyncadd [#allocation4], %s42
      %s45 = sshll.u32 [#allocation3], 4
      %s46 = int_to_ptr.vmem [resolvable:$true] %s45
      %48 = dma.hbm_to_vmem [thread:$0]  %s0, 128, %s46, [#allocation4]
    $region5: #{tpu_custom_call.1} parent=1 // pred_fallthru
      _
    // Predicated region
    $region6: #{tpu_custom_call.1} parent=1 // pred_check
      _
    $region7: #{tpu_custom_call.1} parent=1 // pred_check_branch
      %50 = sbr.rel (0) target = $region9
    $region8: #{tpu_custom_call.1} parent=1 // pred_region
      _
    $region9: #{tpu_custom_call.1} parent=1 // pred_fallthru
      _
    // Predicated region
    $region10: #{tpu_custom_call.1} parent=1 // pred_check
      _
    $region11: #{tpu_custom_call.1} parent=1 // pred_check_branch
      %52 = sbr.rel (0) target = $region13
    $region12: #{tpu_custom_call.1} parent=1 // pred_region
      _
    $region13: #{tpu_custom_call.1} parent=1 // pred_fallthru
      _
    // Predicated region
    $region14: #{tpu_custom_call.1} parent=1 // pred_check
      _
    $region15: #{tpu_custom_call.1} parent=1 // pred_check_branch
      %54 = sbr.rel (0) target = $region17
    $region16: #{tpu_custom_call.1} parent=1 // pred_region
      _
    $region17: #{tpu_custom_call.1} parent=1 // pred_fallthru
      _
    // Predicated region
    $region18: #{tpu_custom_call.1} parent=1 // pred_check
      _
    $region19: #{tpu_custom_call.1} parent=1 // pred_check_branch
      %56 = sbr.rel (0) target = $region21
    $region20: #{tpu_custom_call.1} parent=1 // pred_region
      %s58 = ssub.s32 1024, 1024
      %59 = vsyncadd [#allocation7], %s58
      %s60 = sshll.u32 [#allocation6], 4
      %s61 = int_to_ptr.vmem [resolvable:$true] %s60
      %66 = dma.hbm_to_vmem [thread:$0]  %s4, 1024, %s61, [#allocation7], 64, 64, 4
    $region21: #{tpu_custom_call.1} parent=1 // pred_fallthru
      _
    // Predicated region
    $region22: #{tpu_custom_call.1} parent=1 // pred_check
      _
    $region23: #{tpu_custom_call.1} parent=1 // pred_check_branch
      %68 = sbr.rel (0) target = $region25
    $region24: #{tpu_custom_call.1} parent=1 // pred_region
      _
    $region25: #{tpu_custom_call.1} parent=1 // pred_fallthru
      _
    // Predicated region
    $region26: #{tpu_custom_call.1} parent=1 // pred_check
      _
    $region27: #{tpu_custom_call.1} parent=1 // pred_check_branch
      %70 = sbr.rel (0) target = $region29
    $region28: #{tpu_custom_call.1} parent=1 // pred_region
      %s72 = ssub.s32 1024, 1024
      %73 = vsyncadd [#allocation7], %s72
      %s74 = sshll.u32 [#allocation8], 4
      %s75 = int_to_ptr.vmem [resolvable:$true] %s74
      %80 = dma.hbm_to_vmem [thread:$0]  %s6, 1024, %s75, [#allocation7], 64, 64, 4
    $region29: #{tpu_custom_call.1} parent=1 // pred_fallthru
      _
    // Predicated region
    $region30: #{tpu_custom_call.1} parent=1 // pred_check
      _
    $region31: #{tpu_custom_call.1} parent=1 // pred_check_branch
      %82 = sbr.rel (0) target = $region33
    $region32: #{tpu_custom_call.1} parent=1 // pred_region
      _
    $region33: #{tpu_custom_call.1} parent=1 // pred_fallthru
      _
    // Predicated region
    $region34: #{tpu_custom_call.1} parent=1 // pred_check
      _
    $region35: #{tpu_custom_call.1} parent=1 // pred_check_branch
      %84 = sbr.rel (0) target = $region37
    $region36: #{tpu_custom_call.1} parent=1 // pred_region
      %s86 = ssub.s32 1024, 1024
      %87 = vsyncadd [#allocation10], %s86
      %s88 = sshll.u32 [#allocation9], 4
      %s89 = int_to_ptr.vmem [resolvable:$true] %s88
      %94 = dma.hbm_to_vmem [thread:$0]  %s8, 1024, %s89, [#allocation10], 64, 64, 4
    $region37: #{tpu_custom_call.1} parent=1 // pred_fallthru
      _
    // Predicated region
    $region38: #{tpu_custom_call.1} parent=1 // pred_check
      _
    $region39: #{tpu_custom_call.1} parent=1 // pred_check_branch
      %96 = sbr.rel (0) target = $region41
    $region40: #{tpu_custom_call.1} parent=1 // pred_region
      _
    $region41: #{tpu_custom_call.1} parent=1 // pred_fallthru
      _
    // Predicated region
    $region42: #{tpu_custom_call.1} parent=1 // pred_check
      _
    $region43: #{tpu_custom_call.1} parent=1 // pred_check_branch
      %98 = sbr.rel (0) target = $region45
    $region44: #{tpu_custom_call.1} parent=1 // pred_region
      %s100 = ssub.s32 1024, 1024
      %101 = vsyncadd [#allocation10], %s100
      %s102 = sshll.u32 [#allocation11], 4
      %s103 = int_to_ptr.vmem [resolvable:$true] %s102
      %108 = dma.hbm_to_vmem [thread:$0]  %s10, 1024, %s103, [#allocation10], 64, 64, 4
    $region45: #{tpu_custom_call.1} parent=1 // pred_fallthru
      _
    // Predicated region
    $region46: #{tpu_custom_call.1} parent=1 // pred_check
      _
    $region47: #{tpu_custom_call.1} parent=1 // pred_check_branch
      %110 = sbr.rel (0) target = $region49
    $region48: #{tpu_custom_call.1} parent=1 // pred_region
      _
    $region49: #{tpu_custom_call.1} parent=1 // pred_fallthru
      _
    // Predicated region
    $region50: #{tpu_custom_call.1} parent=1 // pred_check
      _
    $region51: #{tpu_custom_call.1} parent=1 // pred_check_branch
      %112 = sbr.rel (0) target = $region53
    $region52: #{tpu_custom_call.1} parent=1 // pred_region
      %s114 = ssub.s32 1024, 1024
      %115 = vsyncadd [#allocation13], %s114
      %s116 = sshll.u32 [#allocation12], 4
      %s117 = int_to_ptr.vmem [resolvable:$true] %s116
      %122 = dma.hbm_to_vmem [thread:$0]  %s12, 1024, %s117, [#allocation13], 64, 64, 4
    $region53: #{tpu_custom_call.1} parent=1 // pred_fallthru
      _
    // Predicated region
    $region54: #{tpu_custom_call.1} parent=1 // pred_check
      _
    $region55: #{tpu_custom_call.1} parent=1 // pred_check_branch
      %124 = sbr.rel (0) target = $region57
    $region56: #{tpu_custom_call.1} parent=1 // pred_region
      %s126 = ssub.s32 16, 16
      %127 = vsyncadd [#allocation13], %s126
      %s129 = sshll.u32 [#allocation14], 4
      %s130 = int_to_ptr.vmem [resolvable:$true] %s129
      %132 = dma.hbm_to_vmem [thread:$0]  %s13, 16, %s130, [#allocation13]
    $region57: #{tpu_custom_call.1} parent=1 // pred_fallthru
      _
    // Predicated region
    $region58: #{tpu_custom_call.1} parent=1 // pred_check
      _
    $region59: #{tpu_custom_call.1} parent=1 // pred_check_branch
      %134 = sbr.rel (0) target = $region61
    $region60: #{tpu_custom_call.1} parent=1 // pred_region
      _
    $region61: #{tpu_custom_call.1} parent=1 // pred_fallthru
      _
    // Predicated region
    $region62: #{tpu_custom_call.1} parent=1 // pred_check
      _
    $region63: #{tpu_custom_call.1} parent=1 // pred_check_branch
      %136 = sbr.rel (0) target = $region65
    $region64: #{tpu_custom_call.1} parent=1 // pred_region
      _
    $region65: #{tpu_custom_call.1} parent=1 // pred_fallthru
      _
    // Predicated region
    $region66: #{tpu_custom_call.1} parent=1 // pred_check
      _
    $region67: #{tpu_custom_call.1} parent=1 // pred_check_branch
      %138 = sbr.rel (0) target = $region69
    $region68: #{tpu_custom_call.1} parent=1 // pred_region
      %s140 = ssub.s32 1024, 1024
      %141 = vsyncadd [#allocation16], %s140
      %s142 = sshll.u32 [#allocation15], 4
      %s143 = int_to_ptr.vmem [resolvable:$true] %s142
      %148 = dma.hbm_to_vmem [thread:$0]  %s16, 1024, %s143, [#allocation16], 64, 64, 4
    $region69: #{tpu_custom_call.1} parent=1 // pred_fallthru
      _
    // Predicated region
    $region70: #{tpu_custom_call.1} parent=1 // pred_check
      _
    $region71: #{tpu_custom_call.1} parent=1 // pred_check_branch
      %150 = sbr.rel (0) target = $region73
    $region72: #{tpu_custom_call.1} parent=1 // pred_region
      _
    $region73: #{tpu_custom_call.1} parent=1 // pred_fallthru
      _
    // Predicated region
    $region74: #{tpu_custom_call.1} parent=1 // pred_check
      _
    $region75: #{tpu_custom_call.1} parent=1 // pred_check_branch
      %152 = sbr.rel (0) target = $region77
    $region76: #{tpu_custom_call.1} parent=1 // pred_region
      %s154 = ssub.s32 1024, 1024
      %155 = vsyncadd [#allocation16], %s154
      %s156 = sshll.u32 [#allocation17], 4
      %s157 = int_to_ptr.vmem [resolvable:$true] %s156
      %162 = dma.hbm_to_vmem [thread:$0]  %s18, 1024, %s157, [#allocation16], 64, 64, 4
    $region77: #{tpu_custom_call.1} parent=1 // pred_fallthru
      _
    // Predicated region
    $region78: #{tpu_custom_call.1} parent=1 // pred_check
      _
    $region79: #{tpu_custom_call.1} parent=1 // pred_check_branch
      %164 = sbr.rel (0) target = $region81
    $region80: #{tpu_custom_call.1} parent=1 // pred_region
      _
    $region81: #{tpu_custom_call.1} parent=1 // pred_fallthru
      _
    // Predicated region
    $region82: #{tpu_custom_call.1} parent=1 // pred_check
      _
    $region83: #{tpu_custom_call.1} parent=1 // pred_check_branch
      %166 = sbr.rel (0) target = $region85
    $region84: #{tpu_custom_call.1} parent=1 // pred_region
      %s168 = ssub.s32 1024, 1024
      %169 = vsyncadd [#allocation19], %s168
      %s170 = sshll.u32 [#allocation18], 4
      %s171 = int_to_ptr.vmem [resolvable:$true] %s170
      %176 = dma.hbm_to_vmem [thread:$0]  %s20, 1024, %s171, [#allocation19], 64, 64, 4
    $region85: #{tpu_custom_call.1} parent=1 // pred_fallthru
      _
    // Predicated region
    $region86: #{tpu_custom_call.1} parent=1 // pred_check
      _
    $region87: #{tpu_custom_call.1} parent=1 // pred_check_branch
      %178 = sbr.rel (0) target = $region89
    $region88: #{tpu_custom_call.1} parent=1 // pred_region
      _
    $region89: #{tpu_custom_call.1} parent=1 // pred_fallthru
      _
    // Predicated region
    $region90: #{tpu_custom_call.1} parent=1 // pred_check
      _
    $region91: #{tpu_custom_call.1} parent=1 // pred_check_branch
      %180 = sbr.rel (0) target = $region93
    $region92: #{tpu_custom_call.1} parent=1 // pred_region
      %181 = dma.done [#allocation4], 128
    $region93: #{tpu_custom_call.1} parent=1 // pred_fallthru
      _
    // Predicated region
    $region94: #{tpu_custom_call.1} parent=1 // pred_check
      _
    $region95: #{tpu_custom_call.1} parent=1 // pred_check_branch
      %183 = sbr.rel (0) target = $region97
    $region96: #{tpu_custom_call.1} parent=1 // pred_region
      %184 = dma.done [#allocation7], 1024
    $region97: #{tpu_custom_call.1} parent=1 // pred_fallthru
      _
    // Predicated region
    $region98: #{tpu_custom_call.1} parent=1 // pred_check
      _
    $region99: #{tpu_custom_call.1} parent=1 // pred_check_branch
      %186 = sbr.rel (0) target = $region101
    $region100: #{tpu_custom_call.1} parent=1 // pred_region
      %187 = dma.done [#allocation7], 1024
    $region101: #{tpu_custom_call.1} parent=1 // pred_fallthru
      _
    // Predicated region
    $region102: #{tpu_custom_call.1} parent=1 // pred_check
      _
    $region103: #{tpu_custom_call.1} parent=1 // pred_check_branch
      %189 = sbr.rel (0) target = $region105
    $region104: #{tpu_custom_call.1} parent=1 // pred_region
      %190 = dma.done [#allocation10], 1024
    $region105: #{tpu_custom_call.1} parent=1 // pred_fallthru
      _
    // Predicated region
    $region106: #{tpu_custom_call.1} parent=1 // pred_check
      _
    $region107: #{tpu_custom_call.1} parent=1 // pred_check_branch
      %192 = sbr.rel (0) target = $region109
    $region108: #{tpu_custom_call.1} parent=1 // pred_region
      %193 = dma.done [#allocation10], 1024
    $region109: #{tpu_custom_call.1} parent=1 // pred_fallthru
      _
    // Predicated region
    $region110: #{tpu_custom_call.1} parent=1 // pred_check
      _
    $region111: #{tpu_custom_call.1} parent=1 // pred_check_branch
      %195 = sbr.rel (0) target = $region113
    $region112: #{tpu_custom_call.1} parent=1 // pred_region
      %196 = dma.done [#allocation13], 1024
    $region113: #{tpu_custom_call.1} parent=1 // pred_fallthru
      _
    // Predicated region
    $region114: #{tpu_custom_call.1} parent=1 // pred_check
      _
    $region115: #{tpu_custom_call.1} parent=1 // pred_check_branch
      %198 = sbr.rel (0) target = $region117
    $region116: #{tpu_custom_call.1} parent=1 // pred_region
      %199 = dma.done [#allocation13], 16
    $region117: #{tpu_custom_call.1} parent=1 // pred_fallthru
      _
    // Predicated region
    $region118: #{tpu_custom_call.1} parent=1 // pred_check
      _
    $region119: #{tpu_custom_call.1} parent=1 // pred_check_branch
      %201 = sbr.rel (0) target = $region121
    $region120: #{tpu_custom_call.1} parent=1 // pred_region
      %202 = dma.done [#allocation16], 1024
    $region121: #{tpu_custom_call.1} parent=1 // pred_fallthru
      _
    // Predicated region
    $region122: #{tpu_custom_call.1} parent=1 // pred_check
      _
    $region123: #{tpu_custom_call.1} parent=1 // pred_check_branch
      %204 = sbr.rel (0) target = $region125
    $region124: #{tpu_custom_call.1} parent=1 // pred_region
      %205 = dma.done [#allocation16], 1024
    $region125: #{tpu_custom_call.1} parent=1 // pred_fallthru
      _
    // Predicated region
    $region126: #{tpu_custom_call.1} parent=1 // pred_check
      _
    $region127: #{tpu_custom_call.1} parent=1 // pred_check_branch
      %207 = sbr.rel (0) target = $region129
    $region128: #{tpu_custom_call.1} parent=1 // pred_region
      %208 = dma.done [#allocation19], 1024
    $region129: #{tpu_custom_call.1} parent=1 // pred_fallthru
      _
    %v210 = vld [vmem:[#allocation3] sm:$0xff]
    %v211 = vld [vmem:[%s1] sm:$0xff]
    %v212 = vld [vmem:[%s2] sm:$0xff]
    %v213 = vld [vmem:[%s3] sm:$0xf]
    %v214 = vpack.c.bf16 %v210, %v210
    %v215 = vld [vmem:[#allocation6] sm:$0xf]
    %v216 = vld [vmem:[#allocation6 + $0x4] sm:$0xf]
    %v217 = vld [vmem:[#allocation6 + $0x8] sm:$0xf]
    %v218 = vld [vmem:[#allocation6 + $0xc] sm:$0xf]
    %v219 = vld [vmem:[#allocation6 + $0x10] sm:$0xf]
    %v220 = vld [vmem:[#allocation6 + $0x14] sm:$0xf]
    %v221 = vld [vmem:[#allocation6 + $0x18] sm:$0xf]
    %v222 = vld [vmem:[#allocation6 + $0x1c] sm:$0xf]
    %v223 = vld [vmem:[#allocation6 + $0x20] sm:$0xf]
    %v224 = vld [vmem:[#allocation6 + $0x24] sm:$0xf]
    %v225 = vld [vmem:[#allocation6 + $0x28] sm:$0xf]
    %v226 = vld [vmem:[#allocation6 + $0x2c] sm:$0xf]
    %v227 = vld [vmem:[#allocation6 + $0x30] sm:$0xf]
    %v228 = vld [vmem:[#allocation6 + $0x34] sm:$0xf]
    %v229 = vld [vmem:[#allocation6 + $0x38] sm:$0xf]
    %v230 = vld [vmem:[#allocation6 + $0x3c] sm:$0xf]
    %v247 = vunpack.c.l.b16 %v215
    %v248 = vunpack.c.l.b16 %v216
    %v249 = vunpack.c.l.b16 %v217
    %v250 = vunpack.c.l.b16 %v218
    %v251 = vunpack.c.l.b16 %v219
    %v252 = vunpack.c.l.b16 %v220
    %v253 = vunpack.c.l.b16 %v221
    %v254 = vunpack.c.l.b16 %v222
    %v255 = vunpack.c.l.b16 %v223
    %v256 = vunpack.c.l.b16 %v224
    %v257 = vunpack.c.l.b16 %v225
    %v258 = vunpack.c.l.b16 %v226
    %v259 = vunpack.c.l.b16 %v227
    %v260 = vunpack.c.l.b16 %v228
    %v261 = vunpack.c.l.b16 %v229
    %v262 = vunpack.c.l.b16 %v230
    %v263 = vpack.c.b16 %v248, %v247
    %v264 = vpack.c.b16 %v250, %v249
    %v265 = vpack.c.b16 %v252, %v251
    %v266 = vpack.c.b16 %v254, %v253
    %v267 = vpack.c.b16 %v256, %v255
    %v268 = vpack.c.b16 %v258, %v257
    %v269 = vpack.c.b16 %v260, %v259
    %v270 = vpack.c.b16 %v262, %v261
    %279 = vmatprep.subr.bf16.mxu0 0
    %280 = vmatpush1.bf16.msra.mxu0 %v263
    %281 = vmatprep.subr.bf16.mxu0 0
    %282 = vmatpush1.bf16.msra.mxu0 %v264
    %283 = vmatprep.subr.bf16.mxu0 0
    %284 = vmatpush1.bf16.msra.mxu0 %v265
    %285 = vmatprep.subr.bf16.mxu0 0
    %286 = vmatpush1.bf16.msra.mxu0 %v266
    %287 = vmatprep.subr.bf16.mxu0 0
    %288 = vmatpush1.bf16.msra.mxu0 %v267
    %289 = vmatprep.subr.bf16.mxu0 0
    %290 = vmatpush1.bf16.msra.mxu0 %v268
    %291 = vmatprep.subr.bf16.mxu0 0
    %292 = vmatpush1.bf16.msra.mxu0 %v269
    %293 = vmatprep.subr.bf16.mxu0 0
    %294 = vmatpush1.bf16.msra.mxu0 %v270
    %295 = vmatprep.subr.bf16.mxu0 0
    %296 = vmatpush1.bf16.msra.mxu0 0
    %297 = vmatprep.subr.bf16.mxu0 0
    %298 = vmatpush1.bf16.msra.mxu0 0
    %299 = vmatprep.subr.bf16.mxu0 0
    %300 = vmatpush1.bf16.msra.mxu0 0
    %301 = vmatprep.subr.bf16.mxu0 0
    %302 = vmatpush1.bf16.msra.mxu0 0
    %303 = vmatprep.subr.bf16.mxu0 0
    %304 = vmatpush1.bf16.msra.mxu0 0
    %305 = vmatprep.subr.bf16.mxu0 0
    %306 = vmatpush1.bf16.msra.mxu0 0
    %307 = vmatprep.subr.bf16.mxu0 0
    %308 = vmatpush1.bf16.msra.mxu0 0
    %309 = vmatprep.subr.bf16.mxu0 0
    %310 = vmatpush1.bf16.msra.mxu0 0
    %311 = vmatprep.mubr.bf16.mxu0 0
    %312 = vmatmul.mubr.bf16.gmra.mrb[0].mxu0 %v214
    %v313 = vpop.f32.mrb[0].mxu0
    %v314 = vadd.f32 0.0, %v313
    %v315 = vpop.f32.mrb[0].mxu0
    %v316 = vpop.f32.mrb[0].mxu0
    %v317 = vpop.f32.mrb[0].mxu0
    %318 = vdwg.mxu0
    %320 = vset.pattern.permute.xlu0 0
    %321 = vperm.xlu0 %320, %v211
    %v322 = vpop.permute.xlu0 %321
    %v324 = vmul.f32 %v314, %v322
    %v325 = vpack.c.bf16 %v324, %v324
    %v326 = vld [vmem:[%s5] sm:$0x1]
    %v328 = vlaneseq
    %v329 = vshrl.u32 %v328, 7
    %v330 = vsub.s32 0, %v329
    %v331 = vrot.slane %v326, %v330
    %vm333 = vcmask 64512
    %v335 = vsel %vm333, %v213, 0
    %vm337 = vcmask 1043456
    %v339 = vsel %vm337, %v325, 0
    %341 = vmatprep.subr.bf16.mxu0 0
    %342 = vmatpush1.bf16.msra.mxu0 %v339
    %343 = vmatprep.subr.bf16.mxu0 0
    %344 = vmatpush1.bf16.msra.mxu0 0
    %345 = vmatprep.subr.bf16.mxu0 0
    %346 = vmatpush1.bf16.msra.mxu0 0
    %347 = vmatprep.subr.bf16.mxu0 0
    %348 = vmatpush1.bf16.msra.mxu0 0
    %349 = vmatprep.subr.bf16.mxu0 0
    %350 = vmatpush1.bf16.msra.mxu0 0
    %351 = vmatprep.subr.bf16.mxu0 0
    %352 = vmatpush1.bf16.msra.mxu0 0
    %353 = vmatprep.subr.bf16.mxu0 0
    %354 = vmatpush1.bf16.msra.mxu0 0
    %355 = vmatprep.subr.bf16.mxu0 0
    %356 = vmatpush1.bf16.msra.mxu0 0
    %357 = vmatprep.subr.bf16.mxu0 0
    %358 = vmatpush1.bf16.msra.mxu0 0
    %359 = vmatprep.subr.bf16.mxu0 0
    %360 = vmatpush1.bf16.msra.mxu0 0
    %361 = vmatprep.subr.bf16.mxu0 0
    %362 = vmatpush1.bf16.msra.mxu0 0
    %363 = vmatprep.subr.bf16.mxu0 0
    %364 = vmatpush1.bf16.msra.mxu0 0
    %365 = vmatprep.subr.bf16.mxu0 0
    %366 = vmatpush1.bf16.msra.mxu0 0
    %367 = vmatprep.subr.bf16.mxu0 0
    %368 = vmatpush1.bf16.msra.mxu0 0
    %369 = vmatprep.subr.bf16.mxu0 0
    %370 = vmatpush1.bf16.msra.mxu0 0
    %371 = vmatprep.subr.bf16.mxu0 0
    %372 = vmatpush1.bf16.msra.mxu0 0
    %373 = vmatprep.mubr.bf16.mxu0 0
    %374 = vmatmul.mubr.bf16.gmra.mrb[0].mxu0 %v335
    %v375 = vpop.f32.mrb[0].mxu0
    %v376 = vadd.f32 %v331, %v375
    %v377 = vpop.f32.mrb[0].mxu0
    %v378 = vpop.f32.mrb[0].mxu0
    %v379 = vpop.f32.mrb[0].mxu0
    %380 = vdwg.mxu0
    %v381 = vmax.f32 %v376, 0.0
    %383 = vset.pattern.permute.xlu0 0
    %384 = vperm.xlu0 %383, %v212
    %v385 = vpop.permute.xlu0 %384
    %v387 = vmul.f32 %v314, %v385
    %v388 = vpack.c.bf16 %v387, %v387
    %v390 = vsel %vm337, %v388, 0
    %392 = vmatprep.subr.bf16.mxu0 0
    %393 = vmatpush1.bf16.msra.mxu0 %v390
    %394 = vmatprep.subr.bf16.mxu0 0
    %395 = vmatpush1.bf16.msra.mxu0 0
    %396 = vmatprep.subr.bf16.mxu0 0
    %397 = vmatpush1.bf16.msra.mxu0 0
    %398 = vmatprep.subr.bf16.mxu0 0
    %399 = vmatpush1.bf16.msra.mxu0 0
    %400 = vmatprep.subr.bf16.mxu0 0
    %401 = vmatpush1.bf16.msra.mxu0 0
    %402 = vmatprep.subr.bf16.mxu0 0
    %403 = vmatpush1.bf16.msra.mxu0 0
    %404 = vmatprep.subr.bf16.mxu0 0
    %405 = vmatpush1.bf16.msra.mxu0 0
    %406 = vmatprep.subr.bf16.mxu0 0
    %407 = vmatpush1.bf16.msra.mxu0 0
    %408 = vmatprep.subr.bf16.mxu0 0
    %409 = vmatpush1.bf16.msra.mxu0 0
    %410 = vmatprep.subr.bf16.mxu0 0
    %411 = vmatpush1.bf16.msra.mxu0 0
    %412 = vmatprep.subr.bf16.mxu0 0
    %413 = vmatpush1.bf16.msra.mxu0 0
    %414 = vmatprep.subr.bf16.mxu0 0
    %415 = vmatpush1.bf16.msra.mxu0 0
    %416 = vmatprep.subr.bf16.mxu0 0
    %417 = vmatpush1.bf16.msra.mxu0 0
    %418 = vmatprep.subr.bf16.mxu0 0
    %419 = vmatpush1.bf16.msra.mxu0 0
    %420 = vmatprep.subr.bf16.mxu0 0
    %421 = vmatpush1.bf16.msra.mxu0 0
    %422 = vmatprep.subr.bf16.mxu0 0
    %423 = vmatpush1.bf16.msra.mxu0 0
    %424 = vmatprep.mubr.bf16.mxu0 0
    %425 = vmatmul.mubr.bf16.gmra.mrb[0].mxu0 %v335
    %v426 = vpop.f32.mrb[0].mxu0
    %v427 = vadd.f32 %v331, %v426
    %v428 = vpop.f32.mrb[0].mxu0
    %v429 = vpop.f32.mrb[0].mxu0
    %v430 = vpop.f32.mrb[0].mxu0
    %431 = vdwg.mxu0
    %v432 = vmax.f32 %v427, 0.0
    %v433 = vmul.f32 %v381, %v322
    %v434 = vpack.c.bf16 %v433, %v433
    %v435 = vld [vmem:[#allocation8] sm:$0xf]
    %v436 = vld [vmem:[#allocation8 + $0x4] sm:$0xf]
    %v437 = vld [vmem:[#allocation8 + $0x8] sm:$0xf]
    %v438 = vld [vmem:[#allocation8 + $0xc] sm:$0xf]
    %v439 = vld [vmem:[#allocation8 + $0x10] sm:$0xf]
    %v440 = vld [vmem:[#allocation8 + $0x14] sm:$0xf]
    %v441 = vld [vmem:[#allocation8 + $0x18] sm:$0xf]
    %v442 = vld [vmem:[#allocation8 + $0x1c] sm:$0xf]
    %v443 = vld [vmem:[#allocation8 + $0x20] sm:$0xf]
    %v444 = vld [vmem:[#allocation8 + $0x24] sm:$0xf]
    %v445 = vld [vmem:[#allocation8 + $0x28] sm:$0xf]
    %v446 = vld [vmem:[#allocation8 + $0x2c] sm:$0xf]
    %v447 = vld [vmem:[#allocation8 + $0x30] sm:$0xf]
    %v448 = vld [vmem:[#allocation8 + $0x34] sm:$0xf]
    %v449 = vld [vmem:[#allocation8 + $0x38] sm:$0xf]
    %v450 = vld [vmem:[#allocation8 + $0x3c] sm:$0xf]
    %v467 = vunpack.c.l.b16 %v435
    %v468 = vunpack.c.l.b16 %v436
    %v469 = vunpack.c.l.b16 %v437
    %v470 = vunpack.c.l.b16 %v438
    %v471 = vunpack.c.l.b16 %v439
    %v472 = vunpack.c.l.b16 %v440
    %v473 = vunpack.c.l.b16 %v441
    %v474 = vunpack.c.l.b16 %v442
    %v475 = vunpack.c.l.b16 %v443
    %v476 = vunpack.c.l.b16 %v444
    %v477 = vunpack.c.l.b16 %v445
    %v478 = vunpack.c.l.b16 %v446
    %v479 = vunpack.c.l.b16 %v447
    %v480 = vunpack.c.l.b16 %v448
    %v481 = vunpack.c.l.b16 %v449
    %v482 = vunpack.c.l.b16 %v450
    %v483 = vpack.c.b16 %v468, %v467
    %v484 = vpack.c.b16 %v470, %v469
    %v485 = vpack.c.b16 %v472, %v471
    %v486 = vpack.c.b16 %v474, %v473
    %v487 = vpack.c.b16 %v476, %v475
    %v488 = vpack.c.b16 %v478, %v477
    %v489 = vpack.c.b16 %v480, %v479
    %v490 = vpack.c.b16 %v482, %v481
    %499 = vmatprep.subr.bf16.mxu0 0
    %500 = vmatpush1.bf16.msra.mxu0 %v483
    %501 = vmatprep.subr.bf16.mxu0 0
    %502 = vmatpush1.bf16.msra.mxu0 %v484
    %503 = vmatprep.subr.bf16.mxu0 0
    %504 = vmatpush1.bf16.msra.mxu0 %v485
    %505 = vmatprep.subr.bf16.mxu0 0
    %506 = vmatpush1.bf16.msra.mxu0 %v486
    %507 = vmatprep.subr.bf16.mxu0 0
    %508 = vmatpush1.bf16.msra.mxu0 %v487
    %509 = vmatprep.subr.bf16.mxu0 0
    %510 = vmatpush1.bf16.msra.mxu0 %v488
    %511 = vmatprep.subr.bf16.mxu0 0
    %512 = vmatpush1.bf16.msra.mxu0 %v489
    %513 = vmatprep.subr.bf16.mxu0 0
    %514 = vmatpush1.bf16.msra.mxu0 %v490
    %515 = vmatprep.subr.bf16.mxu0 0
    %516 = vmatpush1.bf16.msra.mxu0 0
    %517 = vmatprep.subr.bf16.mxu0 0
    %518 = vmatpush1.bf16.msra.mxu0 0
    %519 = vmatprep.subr.bf16.mxu0 0
    %520 = vmatpush1.bf16.msra.mxu0 0
    %521 = vmatprep.subr.bf16.mxu0 0
    %522 = vmatpush1.bf16.msra.mxu0 0
    %523 = vmatprep.subr.bf16.mxu0 0
    %524 = vmatpush1.bf16.msra.mxu0 0
    %525 = vmatprep.subr.bf16.mxu0 0
    %526 = vmatpush1.bf16.msra.mxu0 0
    %527 = vmatprep.subr.bf16.mxu0 0
    %528 = vmatpush1.bf16.msra.mxu0 0
    %529 = vmatprep.subr.bf16.mxu0 0
    %530 = vmatpush1.bf16.msra.mxu0 0
    %531 = vmatprep.mubr.bf16.mxu0 0
    %532 = vmatmul.mubr.bf16.gmra.mrb[0].mxu0 %v434
    %v533 = vpop.f32.mrb[0].mxu0
    %v534 = vadd.f32 0.0, %v533
    %v535 = vpop.f32.mrb[0].mxu0
    %v536 = vpop.f32.mrb[0].mxu0
    %v537 = vpop.f32.mrb[0].mxu0
    %538 = vdwg.mxu0
    %v539 = vpack.c.bf16 %v534, %v534
    %v540 = vld [vmem:[%s7] sm:$0x1]
    %v542 = vlaneseq
    %v543 = vshrl.u32 %v542, 7
    %v544 = vsub.s32 0, %v543
    %v545 = vrot.slane %v540, %v544
    %v548 = vsel %vm337, %v539, 0
    %550 = vmatprep.subr.bf16.mxu0 0
    %551 = vmatpush1.bf16.msra.mxu0 %v548
    %552 = vmatprep.subr.bf16.mxu0 0
    %553 = vmatpush1.bf16.msra.mxu0 0
    %554 = vmatprep.subr.bf16.mxu0 0
    %555 = vmatpush1.bf16.msra.mxu0 0
    %556 = vmatprep.subr.bf16.mxu0 0
    %557 = vmatpush1.bf16.msra.mxu0 0
    %558 = vmatprep.subr.bf16.mxu0 0
    %559 = vmatpush1.bf16.msra.mxu0 0
    %560 = vmatprep.subr.bf16.mxu0 0
    %561 = vmatpush1.bf16.msra.mxu0 0
    %562 = vmatprep.subr.bf16.mxu0 0
    %563 = vmatpush1.bf16.msra.mxu0 0
    %564 = vmatprep.subr.bf16.mxu0 0
    %565 = vmatpush1.bf16.msra.mxu0 0
    %566 = vmatprep.subr.bf16.mxu0 0
    %567 = vmatpush1.bf16.msra.mxu0 0
    %568 = vmatprep.subr.bf16.mxu0 0
    %569 = vmatpush1.bf16.msra.mxu0 0
    %570 = vmatprep.subr.bf16.mxu0 0
    %571 = vmatpush1.bf16.msra.mxu0 0
    %572 = vmatprep.subr.bf16.mxu0 0
    %573 = vmatpush1.bf16.msra.mxu0 0
    %574 = vmatprep.subr.bf16.mxu0 0
    %575 = vmatpush1.bf16.msra.mxu0 0
    %576 = vmatprep.subr.bf16.mxu0 0
    %577 = vmatpush1.bf16.msra.mxu0 0
    %578 = vmatprep.subr.bf16.mxu0 0
    %579 = vmatpush1.bf16.msra.mxu0 0
    %580 = vmatprep.subr.bf16.mxu0 0
    %581 = vmatpush1.bf16.msra.mxu0 0
    %582 = vmatprep.mubr.bf16.mxu0 0
    %583 = vmatmul.mubr.bf16.gmra.mrb[0].mxu0 %v335
    %v584 = vpop.f32.mrb[0].mxu0
    %v585 = vadd.f32 %v545, %v584
    %v586 = vpop.f32.mrb[0].mxu0
    %v587 = vpop.f32.mrb[0].mxu0
    %v588 = vpop.f32.mrb[0].mxu0
    %589 = vdwg.mxu0
    %v590 = vmax.f32 %v585, 0.0
    %v591 = vmul.f32 %v590, %v322
    %v592 = vrot.slane %v591, 4
    %v593 = vadd.f32 %v591, %v592
    %v594 = vrot.slane %v593, 2
    %v595 = vadd.f32 %v593, %v594
    %v596 = vrot.slane %v595, 1
    %v597 = vadd.f32 %v595, %v596
    %vm598 = vcmask 7168
    %v599 = vsel %vm598, %v211, 0.0
    %v600 = vrot.slane %v599, 4
    %v601 = vadd.f32 %v599, %v600
    %v602 = vrot.slane %v601, 2
    %v603 = vadd.f32 %v601, %v602
    %v604 = vrot.slane %v603, 1
    %v605 = vadd.f32 %v603, %v604
    %v606 = vmax.f32 %v605, 1e-12
    %v607 = vrcp.pop %v606
    %609 = vset.pattern.permute.xlu0 0
    %610 = vperm.xlu0 %609, %v607
    %v611 = vpop.permute.xlu0 %610
    %v613 = vmul.f32 %v597, %v611
    %v614 = vxor.u32 %v613, 2147483648
    %v615 = vmul.f32 %v614, 1.442695
    %v616 = vpow.pop %v615
    %v617 = vadd.f32 %v616, 1.0
    %v618 = vrcp.pop %v617
    %v619 = vmul.f32 1.0, %v618
    %v620 = vpack.c.bf16 %v619, %v619
    %v621 = vld [vmem:[#allocation9] sm:$0xf]
    %v622 = vld [vmem:[#allocation9 + $0x4] sm:$0xf]
    %v623 = vld [vmem:[#allocation9 + $0x8] sm:$0xf]
    %v624 = vld [vmem:[#allocation9 + $0xc] sm:$0xf]
    %v625 = vld [vmem:[#allocation9 + $0x10] sm:$0xf]
    %v626 = vld [vmem:[#allocation9 + $0x14] sm:$0xf]
    %v627 = vld [vmem:[#allocation9 + $0x18] sm:$0xf]
    %v628 = vld [vmem:[#allocation9 + $0x1c] sm:$0xf]
    %v629 = vld [vmem:[#allocation9 + $0x20] sm:$0xf]
    %v630 = vld [vmem:[#allocation9 + $0x24] sm:$0xf]
    %v631 = vld [vmem:[#allocation9 + $0x28] sm:$0xf]
    %v632 = vld [vmem:[#allocation9 + $0x2c] sm:$0xf]
    %v633 = vld [vmem:[#allocation9 + $0x30] sm:$0xf]
    %v634 = vld [vmem:[#allocation9 + $0x34] sm:$0xf]
    %v635 = vld [vmem:[#allocation9 + $0x38] sm:$0xf]
    %v636 = vld [vmem:[#allocation9 + $0x3c] sm:$0xf]
    %v653 = vunpack.c.l.b16 %v621
    %v654 = vunpack.c.l.b16 %v622
    %v655 = vunpack.c.l.b16 %v623
    %v656 = vunpack.c.l.b16 %v624
    %v657 = vunpack.c.l.b16 %v625
    %v658 = vunpack.c.l.b16 %v626
    %v659 = vunpack.c.l.b16 %v627
    %v660 = vunpack.c.l.b16 %v628
    %v661 = vunpack.c.l.b16 %v629
    %v662 = vunpack.c.l.b16 %v630
    %v663 = vunpack.c.l.b16 %v631
    %v664 = vunpack.c.l.b16 %v632
    %v665 = vunpack.c.l.b16 %v633
    %v666 = vunpack.c.l.b16 %v634
    %v667 = vunpack.c.l.b16 %v635
    %v668 = vunpack.c.l.b16 %v636
    %v669 = vpack.c.b16 %v654, %v653
    %v670 = vpack.c.b16 %v656, %v655
    %v671 = vpack.c.b16 %v658, %v657
    %v672 = vpack.c.b16 %v660, %v659
    %v673 = vpack.c.b16 %v662, %v661
    %v674 = vpack.c.b16 %v664, %v663
    %v675 = vpack.c.b16 %v666, %v665
    %v676 = vpack.c.b16 %v668, %v667
    %685 = vmatprep.subr.bf16.mxu0 0
    %686 = vmatpush1.bf16.msra.mxu0 %v669
    %687 = vmatprep.subr.bf16.mxu0 0
    %688 = vmatpush1.bf16.msra.mxu0 %v670
    %689 = vmatprep.subr.bf16.mxu0 0
    %690 = vmatpush1.bf16.msra.mxu0 %v671
    %691 = vmatprep.subr.bf16.mxu0 0
    %692 = vmatpush1.bf16.msra.mxu0 %v672
    %693 = vmatprep.subr.bf16.mxu0 0
    %694 = vmatpush1.bf16.msra.mxu0 %v673
    %695 = vmatprep.subr.bf16.mxu0 0
    %696 = vmatpush1.bf16.msra.mxu0 %v674
    %697 = vmatprep.subr.bf16.mxu0 0
    %698 = vmatpush1.bf16.msra.mxu0 %v675
    %699 = vmatprep.subr.bf16.mxu0 0
    %700 = vmatpush1.bf16.msra.mxu0 %v676
    %701 = vmatprep.subr.bf16.mxu0 0
    %702 = vmatpush1.bf16.msra.mxu0 0
    %703 = vmatprep.subr.bf16.mxu0 0
    %704 = vmatpush1.bf16.msra.mxu0 0
    %705 = vmatprep.subr.bf16.mxu0 0
    %706 = vmatpush1.bf16.msra.mxu0 0
    %707 = vmatprep.subr.bf16.mxu0 0
    %708 = vmatpush1.bf16.msra.mxu0 0
    %709 = vmatprep.subr.bf16.mxu0 0
    %710 = vmatpush1.bf16.msra.mxu0 0
    %711 = vmatprep.subr.bf16.mxu0 0
    %712 = vmatpush1.bf16.msra.mxu0 0
    %713 = vmatprep.subr.bf16.mxu0 0
    %714 = vmatpush1.bf16.msra.mxu0 0
    %715 = vmatprep.subr.bf16.mxu0 0
    %716 = vmatpush1.bf16.msra.mxu0 0
    %717 = vmatprep.mubr.bf16.mxu0 0
    %718 = vmatmul.mubr.bf16.gmra.mrb[0].mxu0 %v620
    %v719 = vpop.f32.mrb[0].mxu0
    %v720 = vadd.f32 0.0, %v719
    %v721 = vpop.f32.mrb[0].mxu0
    %v722 = vpop.f32.mrb[0].mxu0
    %v723 = vpop.f32.mrb[0].mxu0
    %724 = vdwg.mxu0
    %v725 = vpack.c.bf16 %v720, %v720
    %v726 = vpack.c.bf16 %v381, %v381
    %v727 = vpack.c.bf16 %v432, %v432
    %v728 = vld [vmem:[#allocation2] sm:$0x1]
    %730 = vset.pattern.permute.xlu0 0
    %731 = vperm.xlu0 %730, %v728
    %v732 = vpop.permute.xlu0 %731
    %v734 = vlaneseq
    %v735 = vshrl.u32 %v734, 7
    %v736 = vsub.s32 0, %v735
    %v737 = vrot.slane %v732, %v736
    %738 = vmatprep.subr.bf16.mxu0 0
    %739 = vmatpush1.bf16.xpose.msra.mxu0 %v726
    %740 = vmatprep.subr.bf16.mxu0 0
    %741 = vmatpush1.bf16.xpose.msra.mxu0 0
    %742 = vmatprep.subr.bf16.mxu0 0
    %743 = vmatpush1.bf16.xpose.msra.mxu0 0
    %744 = vmatprep.subr.bf16.mxu0 0
    %745 = vmatpush1.bf16.xpose.msra.mxu0 0
    %746 = vmatprep.subr.bf16.mxu0 0
    %747 = vmatpush1.bf16.xpose.msra.mxu0 0
    %748 = vmatprep.subr.bf16.mxu0 0
    %749 = vmatpush1.bf16.xpose.msra.mxu0 0
    %750 = vmatprep.subr.bf16.mxu0 0
    %751 = vmatpush1.bf16.xpose.msra.mxu0 0
    %752 = vmatprep.subr.bf16.mxu0 0
    %753 = vmatpush1.bf16.xpose.msra.mxu0 0
    %754 = vmatprep.subr.bf16.mxu0 0
    %755 = vmatpush1.bf16.xpose.msra.mxu0 0
    %756 = vmatprep.subr.bf16.mxu0 0
    %757 = vmatpush1.bf16.xpose.msra.mxu0 0
    %758 = vmatprep.subr.bf16.mxu0 0
    %759 = vmatpush1.bf16.xpose.msra.mxu0 0
    %760 = vmatprep.subr.bf16.mxu0 0
    %761 = vmatpush1.bf16.xpose.msra.mxu0 0
    %762 = vmatprep.subr.bf16.mxu0 0
    %763 = vmatpush1.bf16.xpose.msra.mxu0 0
    %764 = vmatprep.subr.bf16.mxu0 0
    %765 = vmatpush1.bf16.xpose.msra.mxu0 0
    %766 = vmatprep.subr.bf16.mxu0 0
    %767 = vmatpush1.bf16.xpose.msra.mxu0 0
    %768 = vmatprep.subr.bf16.mxu0 0
    %769 = vmatpush1.bf16.xpose.msra.mxu0 0
    %770 = vmatprep.mubr.bf16.mxu0 0
    %771 = vmatmul.mubr.bf16.gmra.mrb[0].mxu0 %v725
    %v772 = vpop.f32.mrb[0].mxu0
    %v773 = vadd.f32 %v737, %v772
    %v774 = vpop.f32.mrb[0].mxu0
    %v775 = vpop.f32.mrb[0].mxu0
    %v776 = vpop.f32.mrb[0].mxu0
    %777 = vdwg.mxu0
    %vm778 = vcmask 57344
    %779 = vst.msk [vmem:[#allocation20] sm:$0x1] %vm778, %v773
    %780 = vmatprep.subr.bf16.mxu0 0
    %781 = vmatpush1.bf16.xpose.msra.mxu0 %v727
    %782 = vmatprep.subr.bf16.mxu0 0
    %783 = vmatpush1.bf16.xpose.msra.mxu0 0
    %784 = vmatprep.subr.bf16.mxu0 0
    %785 = vmatpush1.bf16.xpose.msra.mxu0 0
    %786 = vmatprep.subr.bf16.mxu0 0
    %787 = vmatpush1.bf16.xpose.msra.mxu0 0
    %788 = vmatprep.subr.bf16.mxu0 0
    %789 = vmatpush1.bf16.xpose.msra.mxu0 0
    %790 = vmatprep.subr.bf16.mxu0 0
    %791 = vmatpush1.bf16.xpose.msra.mxu0 0
    %792 = vmatprep.subr.bf16.mxu0 0
    %793 = vmatpush1.bf16.xpose.msra.mxu0 0
    %794 = vmatprep.subr.bf16.mxu0 0
    %795 = vmatpush1.bf16.xpose.msra.mxu0 0
    %796 = vmatprep.subr.bf16.mxu0 0
    %797 = vmatpush1.bf16.xpose.msra.mxu0 0
    %798 = vmatprep.subr.bf16.mxu0 0
    %799 = vmatpush1.bf16.xpose.msra.mxu0 0
    %800 = vmatprep.subr.bf16.mxu0 0
    %801 = vmatpush1.bf16.xpose.msra.mxu0 0
    %802 = vmatprep.subr.bf16.mxu0 0
    %803 = vmatpush1.bf16.xpose.msra.mxu0 0
    %804 = vmatprep.subr.bf16.mxu0 0
    %805 = vmatpush1.bf16.xpose.msra.mxu0 0
    %806 = vmatprep.subr.bf16.mxu0 0
    %807 = vmatpush1.bf16.xpose.msra.mxu0 0
    %808 = vmatprep.subr.bf16.mxu0 0
    %809 = vmatpush1.bf16.xpose.msra.mxu0 0
    %810 = vmatprep.subr.bf16.mxu0 0
    %811 = vmatpush1.bf16.xpose.msra.mxu0 0
    %812 = vmatprep.mubr.bf16.mxu0 0
    %813 = vmatmul.mubr.bf16.gmra.mrb[0].mxu0 %v725
    %v814 = vpop.f32.mrb[0].mxu0
    %v815 = vadd.f32 %v737, %v814
    %v816 = vpop.f32.mrb[0].mxu0
    %v817 = vpop.f32.mrb[0].mxu0
    %v818 = vpop.f32.mrb[0].mxu0
    %819 = vdwg.mxu0
    %821 = vrot.lane.b32.xlu0 %v815, 8
    %v822 = vpop.permute.xlu0 %821
    %vm824 = vcmask 122944
    %825 = vst.msk [vmem:[#allocation20] sm:$0x1] %vm824, %v822
    %v826 = vld [vmem:[#allocation11] sm:$0xf]
    %v827 = vld [vmem:[#allocation11 + $0x4] sm:$0xf]
    %v828 = vld [vmem:[#allocation11 + $0x8] sm:$0xf]
    %v829 = vld [vmem:[#allocation11 + $0xc] sm:$0xf]
    %v830 = vld [vmem:[#allocation11 + $0x10] sm:$0xf]
    %v831 = vld [vmem:[#allocation11 + $0x14] sm:$0xf]
    %v832 = vld [vmem:[#allocation11 + $0x18] sm:$0xf]
    %v833 = vld [vmem:[#allocation11 + $0x1c] sm:$0xf]
    %v834 = vld [vmem:[#allocation11 + $0x20] sm:$0xf]
    %v835 = vld [vmem:[#allocation11 + $0x24] sm:$0xf]
    %v836 = vld [vmem:[#allocation11 + $0x28] sm:$0xf]
    %v837 = vld [vmem:[#allocation11 + $0x2c] sm:$0xf]
    %v838 = vld [vmem:[#allocation11 + $0x30] sm:$0xf]
    %v839 = vld [vmem:[#allocation11 + $0x34] sm:$0xf]
    %v840 = vld [vmem:[#allocation11 + $0x38] sm:$0xf]
    %v841 = vld [vmem:[#allocation11 + $0x3c] sm:$0xf]
    %v842 = vld [vmem:[%s11] sm:$0x1]
    %v843 = vld [vmem:[#allocation12] sm:$0xf]
    %v844 = vld [vmem:[#allocation12 + $0x4] sm:$0xf]
    %v845 = vld [vmem:[#allocation12 + $0x8] sm:$0xf]
    %v846 = vld [vmem:[#allocation12 + $0xc] sm:$0xf]
    %v847 = vld [vmem:[#allocation12 + $0x10] sm:$0xf]
    %v848 = vld [vmem:[#allocation12 + $0x14] sm:$0xf]
    %v849 = vld [vmem:[#allocation12 + $0x18] sm:$0xf]
    %v850 = vld [vmem:[#allocation12 + $0x1c] sm:$0xf]
    %v851 = vld [vmem:[#allocation12 + $0x20] sm:$0xf]
    %v852 = vld [vmem:[#allocation12 + $0x24] sm:$0xf]
    %v853 = vld [vmem:[#allocation12 + $0x28] sm:$0xf]
    %v854 = vld [vmem:[#allocation12 + $0x2c] sm:$0xf]
    %v855 = vld [vmem:[#allocation12 + $0x30] sm:$0xf]
    %v856 = vld [vmem:[#allocation12 + $0x34] sm:$0xf]
    %v857 = vld [vmem:[#allocation12 + $0x38] sm:$0xf]
    %v858 = vld [vmem:[#allocation12 + $0x3c] sm:$0xf]
    %v859 = vld [vmem:[#allocation14] sm:$0x1]
    %v860 = vld [vmem:[%s14] sm:$0xf]
    %v861 = vld [vmem:[%s14 + $0x4] sm:$0xf]
    %v862 = vld [vmem:[%s14 + $0x8] sm:$0xf]
    %v863 = vld [vmem:[%s14 + $0xc] sm:$0xf]
    %v864 = vld [vmem:[%s14 + $0x10] sm:$0xf]
    %v865 = vld [vmem:[%s14 + $0x14] sm:$0xf]
    %v866 = vld [vmem:[%s14 + $0x18] sm:$0xf]
    %v867 = vld [vmem:[%s14 + $0x1c] sm:$0xf]
    %v868 = vld [vmem:[%s14 + $0x20] sm:$0xf]
    %v869 = vld [vmem:[%s14 + $0x24] sm:$0xf]
    %v870 = vld [vmem:[%s14 + $0x28] sm:$0xf]
    %v871 = vld [vmem:[%s14 + $0x2c] sm:$0xf]
    %v872 = vld [vmem:[%s14 + $0x30] sm:$0xf]
    %v873 = vld [vmem:[%s14 + $0x34] sm:$0xf]
    %v874 = vld [vmem:[%s14 + $0x38] sm:$0xf]
    %v875 = vld [vmem:[%s14 + $0x3c] sm:$0xf]
    %v876 = vld [vmem:[%s15] sm:$0x1]
    %v878 = vlaneseq
    %v879 = vshrl.u32 %v878, 7
    %v880 = vsub.s32 0, %v879
    %v881 = vrot.slane %v842, %v880
    %v899 = vunpack.c.l.b16 %v826
    %v900 = vunpack.c.l.b16 %v827
    %v901 = vunpack.c.l.b16 %v828
    %v902 = vunpack.c.l.b16 %v829
    %v903 = vunpack.c.l.b16 %v830
    %v904 = vunpack.c.l.b16 %v831
    %v905 = vunpack.c.l.b16 %v832
    %v906 = vunpack.c.l.b16 %v833
    %v907 = vunpack.c.l.b16 %v834
    %v908 = vunpack.c.l.b16 %v835
    %v909 = vunpack.c.l.b16 %v836
    %v910 = vunpack.c.l.b16 %v837
    %v911 = vunpack.c.l.b16 %v838
    %v912 = vunpack.c.l.b16 %v839
    %v913 = vunpack.c.l.b16 %v840
    %v914 = vunpack.c.l.b16 %v841
    %v915 = vpack.c.b16 %v900, %v899
    %v916 = vpack.c.b16 %v902, %v901
    %v917 = vpack.c.b16 %v904, %v903
    %v918 = vpack.c.b16 %v906, %v905
    %v919 = vpack.c.b16 %v908, %v907
    %v920 = vpack.c.b16 %v910, %v909
    %v921 = vpack.c.b16 %v912, %v911
    %v922 = vpack.c.b16 %v914, %v913
    %931 = vmatprep.subr.bf16.mxu0 0
    %932 = vmatpush1.bf16.msra.mxu0 %v915
    %933 = vmatprep.subr.bf16.mxu0 0
    %934 = vmatpush1.bf16.msra.mxu0 %v916
    %935 = vmatprep.subr.bf16.mxu0 0
    %936 = vmatpush1.bf16.msra.mxu0 %v917
    %937 = vmatprep.subr.bf16.mxu0 0
    %938 = vmatpush1.bf16.msra.mxu0 %v918
    %939 = vmatprep.subr.bf16.mxu0 0
    %940 = vmatpush1.bf16.msra.mxu0 %v919
    %941 = vmatprep.subr.bf16.mxu0 0
    %942 = vmatpush1.bf16.msra.mxu0 %v920
    %943 = vmatprep.subr.bf16.mxu0 0
    %944 = vmatpush1.bf16.msra.mxu0 %v921
    %945 = vmatprep.subr.bf16.mxu0 0
    %946 = vmatpush1.bf16.msra.mxu0 %v922
    %947 = vmatprep.subr.bf16.mxu0 0
    %948 = vmatpush1.bf16.msra.mxu0 0
    %949 = vmatprep.subr.bf16.mxu0 0
    %950 = vmatpush1.bf16.msra.mxu0 0
    %951 = vmatprep.subr.bf16.mxu0 0
    %952 = vmatpush1.bf16.msra.mxu0 0
    %953 = vmatprep.subr.bf16.mxu0 0
    %954 = vmatpush1.bf16.msra.mxu0 0
    %955 = vmatprep.subr.bf16.mxu0 0
    %956 = vmatpush1.bf16.msra.mxu0 0
    %957 = vmatprep.subr.bf16.mxu0 0
    %958 = vmatpush1.bf16.msra.mxu0 0
    %959 = vmatprep.subr.bf16.mxu0 0
    %960 = vmatpush1.bf16.msra.mxu0 0
    %961 = vmatprep.subr.bf16.mxu0 0
    %962 = vmatpush1.bf16.msra.mxu0 0
    %963 = vmatprep.mubr.bf16.mxu0 0
    %964 = vmatmul.mubr.bf16.gmra.mrb[0].mxu0 %v726
    %v965 = vpop.f32.mrb[0].mxu0
    %v966 = vadd.f32 %v881, %v965
    %v967 = vpop.f32.mrb[0].mxu0
    %v968 = vpop.f32.mrb[0].mxu0
    %v969 = vpop.f32.mrb[0].mxu0
    %970 = vdwg.mxu0
    %v971 = vmax.f32 %v966, 0.0
    %v972 = vpack.c.bf16 %v971, %v971
    %v974 = vlaneseq
    %v975 = vshrl.u32 %v974, 7
    %v976 = vsub.s32 0, %v975
    %v977 = vrot.slane %v859, %v976
    %v995 = vunpack.c.l.b16 %v843
    %v996 = vunpack.c.l.b16 %v844
    %v997 = vunpack.c.l.b16 %v845
    %v998 = vunpack.c.l.b16 %v846
    %v999 = vunpack.c.l.b16 %v847
    %v1000 = vunpack.c.l.b16 %v848
    %v1001 = vunpack.c.l.b16 %v849
    %v1002 = vunpack.c.l.b16 %v850
    %v1003 = vunpack.c.l.b16 %v851
    %v1004 = vunpack.c.l.b16 %v852
    %v1005 = vunpack.c.l.b16 %v853
    %v1006 = vunpack.c.l.b16 %v854
    %v1007 = vunpack.c.l.b16 %v855
    %v1008 = vunpack.c.l.b16 %v856
    %v1009 = vunpack.c.l.b16 %v857
    %v1010 = vunpack.c.l.b16 %v858
    %v1011 = vpack.c.b16 %v996, %v995
    %v1012 = vpack.c.b16 %v998, %v997
    %v1013 = vpack.c.b16 %v1000, %v999
    %v1014 = vpack.c.b16 %v1002, %v1001
    %v1015 = vpack.c.b16 %v1004, %v1003
    %v1016 = vpack.c.b16 %v1006, %v1005
    %v1017 = vpack.c.b16 %v1008, %v1007
    %v1018 = vpack.c.b16 %v1010, %v1009
    %1027 = vmatprep.subr.bf16.mxu0 0
    %1028 = vmatpush1.bf16.msra.mxu0 %v1011
    %1029 = vmatprep.subr.bf16.mxu0 0
    %1030 = vmatpush1.bf16.msra.mxu0 %v1012
    %1031 = vmatprep.subr.bf16.mxu0 0
    %1032 = vmatpush1.bf16.msra.mxu0 %v1013
    %1033 = vmatprep.subr.bf16.mxu0 0
    %1034 = vmatpush1.bf16.msra.mxu0 %v1014
    %1035 = vmatprep.subr.bf16.mxu0 0
    %1036 = vmatpush1.bf16.msra.mxu0 %v1015
    %1037 = vmatprep.subr.bf16.mxu0 0
    %1038 = vmatpush1.bf16.msra.mxu0 %v1016
    %1039 = vmatprep.subr.bf16.mxu0 0
    %1040 = vmatpush1.bf16.msra.mxu0 %v1017
    %1041 = vmatprep.subr.bf16.mxu0 0
    %1042 = vmatpush1.bf16.msra.mxu0 %v1018
    %1043 = vmatprep.subr.bf16.mxu0 0
    %1044 = vmatpush1.bf16.msra.mxu0 0
    %1045 = vmatprep.subr.bf16.mxu0 0
    %1046 = vmatpush1.bf16.msra.mxu0 0
    %1047 = vmatprep.subr.bf16.mxu0 0
    %1048 = vmatpush1.bf16.msra.mxu0 0
    %1049 = vmatprep.subr.bf16.mxu0 0
    %1050 = vmatpush1.bf16.msra.mxu0 0
    %1051 = vmatprep.subr.bf16.mxu0 0
    %1052 = vmatpush1.bf16.msra.mxu0 0
    %1053 = vmatprep.subr.bf16.mxu0 0
    %1054 = vmatpush1.bf16.msra.mxu0 0
    %1055 = vmatprep.subr.bf16.mxu0 0
    %1056 = vmatpush1.bf16.msra.mxu0 0
    %1057 = vmatprep.subr.bf16.mxu0 0
    %1058 = vmatpush1.bf16.msra.mxu0 0
    %1059 = vmatprep.mubr.bf16.mxu0 0
    %1060 = vmatmul.mubr.bf16.gmra.mrb[0].mxu0 %v972
    %v1061 = vpop.f32.mrb[0].mxu0
    %v1062 = vadd.f32 %v977, %v1061
    %v1063 = vpop.f32.mrb[0].mxu0
    %v1064 = vpop.f32.mrb[0].mxu0
    %v1065 = vpop.f32.mrb[0].mxu0
    %1066 = vdwg.mxu0
    %v1067 = vmax.f32 %v1062, 0.0
    %v1068 = vpack.c.bf16 %v1067, %v1067
    %v1070 = vlaneseq
    %v1071 = vshrl.u32 %v1070, 7
    %v1072 = vsub.s32 0, %v1071
    %v1073 = vrot.slane %v876, %v1072
    %v1091 = vunpack.c.l.b16 %v860
    %v1092 = vunpack.c.l.b16 %v861
    %v1093 = vunpack.c.l.b16 %v862
    %v1094 = vunpack.c.l.b16 %v863
    %v1095 = vunpack.c.l.b16 %v864
    %v1096 = vunpack.c.l.b16 %v865
    %v1097 = vunpack.c.l.b16 %v866
    %v1098 = vunpack.c.l.b16 %v867
    %v1099 = vunpack.c.l.b16 %v868
    %v1100 = vunpack.c.l.b16 %v869
    %v1101 = vunpack.c.l.b16 %v870
    %v1102 = vunpack.c.l.b16 %v871
    %v1103 = vunpack.c.l.b16 %v872
    %v1104 = vunpack.c.l.b16 %v873
    %v1105 = vunpack.c.l.b16 %v874
    %v1106 = vunpack.c.l.b16 %v875
    %v1107 = vpack.c.b16 %v1092, %v1091
    %v1108 = vpack.c.b16 %v1094, %v1093
    %v1109 = vpack.c.b16 %v1096, %v1095
    %v1110 = vpack.c.b16 %v1098, %v1097
    %v1111 = vpack.c.b16 %v1100, %v1099
    %v1112 = vpack.c.b16 %v1102, %v1101
    %v1113 = vpack.c.b16 %v1104, %v1103
    %v1114 = vpack.c.b16 %v1106, %v1105
    %1123 = vmatprep.subr.bf16.mxu0 0
    %1124 = vmatpush1.bf16.msra.mxu0 %v1107
    %1125 = vmatprep.subr.bf16.mxu0 0
    %1126 = vmatpush1.bf16.msra.mxu0 %v1108
    %1127 = vmatprep.subr.bf16.mxu0 0
    %1128 = vmatpush1.bf16.msra.mxu0 %v1109
    %1129 = vmatprep.subr.bf16.mxu0 0
    %1130 = vmatpush1.bf16.msra.mxu0 %v1110
    %1131 = vmatprep.subr.bf16.mxu0 0
    %1132 = vmatpush1.bf16.msra.mxu0 %v1111
    %1133 = vmatprep.subr.bf16.mxu0 0
    %1134 = vmatpush1.bf16.msra.mxu0 %v1112
    %1135 = vmatprep.subr.bf16.mxu0 0
    %1136 = vmatpush1.bf16.msra.mxu0 %v1113
    %1137 = vmatprep.subr.bf16.mxu0 0
    %1138 = vmatpush1.bf16.msra.mxu0 %v1114
    %1139 = vmatprep.subr.bf16.mxu0 0
    %1140 = vmatpush1.bf16.msra.mxu0 0
    %1141 = vmatprep.subr.bf16.mxu0 0
    %1142 = vmatpush1.bf16.msra.mxu0 0
    %1143 = vmatprep.subr.bf16.mxu0 0
    %1144 = vmatpush1.bf16.msra.mxu0 0
    %1145 = vmatprep.subr.bf16.mxu0 0
    %1146 = vmatpush1.bf16.msra.mxu0 0
    %1147 = vmatprep.subr.bf16.mxu0 0
    %1148 = vmatpush1.bf16.msra.mxu0 0
    %1149 = vmatprep.subr.bf16.mxu0 0
    %1150 = vmatpush1.bf16.msra.mxu0 0
    %1151 = vmatprep.subr.bf16.mxu0 0
    %1152 = vmatpush1.bf16.msra.mxu0 0
    %1153 = vmatprep.subr.bf16.mxu0 0
    %1154 = vmatpush1.bf16.msra.mxu0 0
    %1155 = vmatprep.mubr.bf16.mxu0 0
    %1156 = vmatmul.mubr.bf16.gmra.mrb[0].mxu0 %v1068
    %v1157 = vpop.f32.mrb[0].mxu0
    %v1158 = vadd.f32 %v1073, %v1157
    %v1159 = vpop.f32.mrb[0].mxu0
    %v1160 = vpop.f32.mrb[0].mxu0
    %v1161 = vpop.f32.mrb[0].mxu0
    %1162 = vdwg.mxu0
    %v1163 = vld [vmem:[#allocation15] sm:$0xf]
    %v1164 = vld [vmem:[#allocation15 + $0x4] sm:$0xf]
    %v1165 = vld [vmem:[#allocation15 + $0x8] sm:$0xf]
    %v1166 = vld [vmem:[#allocation15 + $0xc] sm:$0xf]
    %v1167 = vld [vmem:[#allocation15 + $0x10] sm:$0xf]
    %v1168 = vld [vmem:[#allocation15 + $0x14] sm:$0xf]
    %v1169 = vld [vmem:[#allocation15 + $0x18] sm:$0xf]
    %v1170 = vld [vmem:[#allocation15 + $0x1c] sm:$0xf]
    %v1171 = vld [vmem:[#allocation15 + $0x20] sm:$0xf]
    %v1172 = vld [vmem:[#allocation15 + $0x24] sm:$0xf]
    %v1173 = vld [vmem:[#allocation15 + $0x28] sm:$0xf]
    %v1174 = vld [vmem:[#allocation15 + $0x2c] sm:$0xf]
    %v1175 = vld [vmem:[#allocation15 + $0x30] sm:$0xf]
    %v1176 = vld [vmem:[#allocation15 + $0x34] sm:$0xf]
    %v1177 = vld [vmem:[#allocation15 + $0x38] sm:$0xf]
    %v1178 = vld [vmem:[#allocation15 + $0x3c] sm:$0xf]
    %v1179 = vld [vmem:[%s17] sm:$0x1]
    %v1180 = vld [vmem:[#allocation17] sm:$0xf]
    %v1181 = vld [vmem:[#allocation17 + $0x4] sm:$0xf]
    %v1182 = vld [vmem:[#allocation17 + $0x8] sm:$0xf]
    %v1183 = vld [vmem:[#allocation17 + $0xc] sm:$0xf]
    %v1184 = vld [vmem:[#allocation17 + $0x10] sm:$0xf]
    %v1185 = vld [vmem:[#allocation17 + $0x14] sm:$0xf]
    %v1186 = vld [vmem:[#allocation17 + $0x18] sm:$0xf]
    %v1187 = vld [vmem:[#allocation17 + $0x1c] sm:$0xf]
    %v1188 = vld [vmem:[#allocation17 + $0x20] sm:$0xf]
    %v1189 = vld [vmem:[#allocation17 + $0x24] sm:$0xf]
    %v1190 = vld [vmem:[#allocation17 + $0x28] sm:$0xf]
    %v1191 = vld [vmem:[#allocation17 + $0x2c] sm:$0xf]
    %v1192 = vld [vmem:[#allocation17 + $0x30] sm:$0xf]
    %v1193 = vld [vmem:[#allocation17 + $0x34] sm:$0xf]
    %v1194 = vld [vmem:[#allocation17 + $0x38] sm:$0xf]
    %v1195 = vld [vmem:[#allocation17 + $0x3c] sm:$0xf]
    %v1196 = vld [vmem:[%s19] sm:$0x1]
    %v1197 = vld [vmem:[#allocation18] sm:$0xf]
    %v1198 = vld [vmem:[#allocation18 + $0x4] sm:$0xf]
    %v1199 = vld [vmem:[#allocation18 + $0x8] sm:$0xf]
    %v1200 = vld [vmem:[#allocation18 + $0xc] sm:$0xf]
    %v1201 = vld [vmem:[#allocation18 + $0x10] sm:$0xf]
    %v1202 = vld [vmem:[#allocation18 + $0x14] sm:$0xf]
    %v1203 = vld [vmem:[#allocation18 + $0x18] sm:$0xf]
    %v1204 = vld [vmem:[#allocation18 + $0x1c] sm:$0xf]
    %v1205 = vld [vmem:[#allocation18 + $0x20] sm:$0xf]
    %v1206 = vld [vmem:[#allocation18 + $0x24] sm:$0xf]
    %v1207 = vld [vmem:[#allocation18 + $0x28] sm:$0xf]
    %v1208 = vld [vmem:[#allocation18 + $0x2c] sm:$0xf]
    %v1209 = vld [vmem:[#allocation18 + $0x30] sm:$0xf]
    %v1210 = vld [vmem:[#allocation18 + $0x34] sm:$0xf]
    %v1211 = vld [vmem:[#allocation18 + $0x38] sm:$0xf]
    %v1212 = vld [vmem:[#allocation18 + $0x3c] sm:$0xf]
    %v1213 = vld [vmem:[%s21] sm:$0x1]
    %v1214 = vpack.c.bf16 %v590, %v590
    %v1216 = vlaneseq
    %v1217 = vshrl.u32 %v1216, 7
    %v1218 = vsub.s32 0, %v1217
    %v1219 = vrot.slane %v1179, %v1218
    %v1237 = vunpack.c.l.b16 %v1163
    %v1238 = vunpack.c.l.b16 %v1164
    %v1239 = vunpack.c.l.b16 %v1165
    %v1240 = vunpack.c.l.b16 %v1166
    %v1241 = vunpack.c.l.b16 %v1167
    %v1242 = vunpack.c.l.b16 %v1168
    %v1243 = vunpack.c.l.b16 %v1169
    %v1244 = vunpack.c.l.b16 %v1170
    %v1245 = vunpack.c.l.b16 %v1171
    %v1246 = vunpack.c.l.b16 %v1172
    %v1247 = vunpack.c.l.b16 %v1173
    %v1248 = vunpack.c.l.b16 %v1174
    %v1249 = vunpack.c.l.b16 %v1175
    %v1250 = vunpack.c.l.b16 %v1176
    %v1251 = vunpack.c.l.b16 %v1177
    %v1252 = vunpack.c.l.b16 %v1178
    %v1253 = vpack.c.b16 %v1238, %v1237
    %v1254 = vpack.c.b16 %v1240, %v1239
    %v1255 = vpack.c.b16 %v1242, %v1241
    %v1256 = vpack.c.b16 %v1244, %v1243
    %v1257 = vpack.c.b16 %v1246, %v1245
    %v1258 = vpack.c.b16 %v1248, %v1247
    %v1259 = vpack.c.b16 %v1250, %v1249
    %v1260 = vpack.c.b16 %v1252, %v1251
    %1269 = vmatprep.subr.bf16.mxu0 0
    %1270 = vmatpush1.bf16.msra.mxu0 %v1253
    %1271 = vmatprep.subr.bf16.mxu0 0
    %1272 = vmatpush1.bf16.msra.mxu0 %v1254
    %1273 = vmatprep.subr.bf16.mxu0 0
    %1274 = vmatpush1.bf16.msra.mxu0 %v1255
    %1275 = vmatprep.subr.bf16.mxu0 0
    %1276 = vmatpush1.bf16.msra.mxu0 %v1256
    %1277 = vmatprep.subr.bf16.mxu0 0
    %1278 = vmatpush1.bf16.msra.mxu0 %v1257
    %1279 = vmatprep.subr.bf16.mxu0 0
    %1280 = vmatpush1.bf16.msra.mxu0 %v1258
    %1281 = vmatprep.subr.bf16.mxu0 0
    %1282 = vmatpush1.bf16.msra.mxu0 %v1259
    %1283 = vmatprep.subr.bf16.mxu0 0
    %1284 = vmatpush1.bf16.msra.mxu0 %v1260
    %1285 = vmatprep.subr.bf16.mxu0 0
    %1286 = vmatpush1.bf16.msra.mxu0 0
    %1287 = vmatprep.subr.bf16.mxu0 0
    %1288 = vmatpush1.bf16.msra.mxu0 0
    %1289 = vmatprep.subr.bf16.mxu0 0
    %1290 = vmatpush1.bf16.msra.mxu0 0
    %1291 = vmatprep.subr.bf16.mxu0 0
    %1292 = vmatpush1.bf16.msra.mxu0 0
    %1293 = vmatprep.subr.bf16.mxu0 0
    %1294 = vmatpush1.bf16.msra.mxu0 0
    %1295 = vmatprep.subr.bf16.mxu0 0
    %1296 = vmatpush1.bf16.msra.mxu0 0
    %1297 = vmatprep.subr.bf16.mxu0 0
    %1298 = vmatpush1.bf16.msra.mxu0 0
    %1299 = vmatprep.subr.bf16.mxu0 0
    %1300 = vmatpush1.bf16.msra.mxu0 0
    %1301 = vmatprep.mubr.bf16.mxu0 0
    %1302 = vmatmul.mubr.bf16.gmra.mrb[0].mxu0 %v1214
    %v1303 = vpop.f32.mrb[0].mxu0
    %v1304 = vadd.f32 %v1219, %v1303
    %v1305 = vpop.f32.mrb[0].mxu0
    %v1306 = vpop.f32.mrb[0].mxu0
    %v1307 = vpop.f32.mrb[0].mxu0
    %1308 = vdwg.mxu0
    %v1309 = vmax.f32 %v1304, 0.0
    %v1310 = vpack.c.bf16 %v1309, %v1309
    %v1312 = vlaneseq
    %v1313 = vshrl.u32 %v1312, 7
    %v1314 = vsub.s32 0, %v1313
    %v1315 = vrot.slane %v1196, %v1314
    %v1333 = vunpack.c.l.b16 %v1180
    %v1334 = vunpack.c.l.b16 %v1181
    %v1335 = vunpack.c.l.b16 %v1182
    %v1336 = vunpack.c.l.b16 %v1183
    %v1337 = vunpack.c.l.b16 %v1184
    %v1338 = vunpack.c.l.b16 %v1185
    %v1339 = vunpack.c.l.b16 %v1186
    %v1340 = vunpack.c.l.b16 %v1187
    %v1341 = vunpack.c.l.b16 %v1188
    %v1342 = vunpack.c.l.b16 %v1189
    %v1343 = vunpack.c.l.b16 %v1190
    %v1344 = vunpack.c.l.b16 %v1191
    %v1345 = vunpack.c.l.b16 %v1192
    %v1346 = vunpack.c.l.b16 %v1193
    %v1347 = vunpack.c.l.b16 %v1194
    %v1348 = vunpack.c.l.b16 %v1195
    %v1349 = vpack.c.b16 %v1334, %v1333
    %v1350 = vpack.c.b16 %v1336, %v1335
    %v1351 = vpack.c.b16 %v1338, %v1337
    %v1352 = vpack.c.b16 %v1340, %v1339
    %v1353 = vpack.c.b16 %v1342, %v1341
    %v1354 = vpack.c.b16 %v1344, %v1343
    %v1355 = vpack.c.b16 %v1346, %v1345
    %v1356 = vpack.c.b16 %v1348, %v1347
    %1365 = vmatprep.subr.bf16.mxu0 0
    %1366 = vmatpush1.bf16.msra.mxu0 %v1349
    %1367 = vmatprep.subr.bf16.mxu0 0
    %1368 = vmatpush1.bf16.msra.mxu0 %v1350
    %1369 = vmatprep.subr.bf16.mxu0 0
    %1370 = vmatpush1.bf16.msra.mxu0 %v1351
    %1371 = vmatprep.subr.bf16.mxu0 0
    %1372 = vmatpush1.bf16.msra.mxu0 %v1352
    %1373 = vmatprep.subr.bf16.mxu0 0
    %1374 = vmatpush1.bf16.msra.mxu0 %v1353
    %1375 = vmatprep.subr.bf16.mxu0 0
    %1376 = vmatpush1.bf16.msra.mxu0 %v1354
    %1377 = vmatprep.subr.bf16.mxu0 0
    %1378 = vmatpush1.bf16.msra.mxu0 %v1355
    %1379 = vmatprep.subr.bf16.mxu0 0
    %1380 = vmatpush1.bf16.msra.mxu0 %v1356
    %1381 = vmatprep.subr.bf16.mxu0 0
    %1382 = vmatpush1.bf16.msra.mxu0 0
    %1383 = vmatprep.subr.bf16.mxu0 0
    %1384 = vmatpush1.bf16.msra.mxu0 0
    %1385 = vmatprep.subr.bf16.mxu0 0
    %1386 = vmatpush1.bf16.msra.mxu0 0
    %1387 = vmatprep.subr.bf16.mxu0 0
    %1388 = vmatpush1.bf16.msra.mxu0 0
    %1389 = vmatprep.subr.bf16.mxu0 0
    %1390 = vmatpush1.bf16.msra.mxu0 0
    %1391 = vmatprep.subr.bf16.mxu0 0
    %1392 = vmatpush1.bf16.msra.mxu0 0
    %1393 = vmatprep.subr.bf16.mxu0 0
    %1394 = vmatpush1.bf16.msra.mxu0 0
    %1395 = vmatprep.subr.bf16.mxu0 0
    %1396 = vmatpush1.bf16.msra.mxu0 0
    %1397 = vmatprep.mubr.bf16.mxu0 0
    %1398 = vmatmul.mubr.bf16.gmra.mrb[0].mxu0 %v1310
    %v1399 = vpop.f32.mrb[0].mxu0
    %v1400 = vadd.f32 %v1315, %v1399
    %v1401 = vpop.f32.mrb[0].mxu0
    %v1402 = vpop.f32.mrb[0].mxu0
    %v1403 = vpop.f32.mrb[0].mxu0
    %1404 = vdwg.mxu0
    %v1405 = vmax.f32 %v1400, 0.0
    %v1406 = vpack.c.bf16 %v1405, %v1405
    %v1408 = vlaneseq
    %v1409 = vshrl.u32 %v1408, 7
    %v1410 = vsub.s32 0, %v1409
    %v1411 = vrot.slane %v1213, %v1410
    %v1429 = vunpack.c.l.b16 %v1197
    %v1430 = vunpack.c.l.b16 %v1198
    %v1431 = vunpack.c.l.b16 %v1199
    %v1432 = vunpack.c.l.b16 %v1200
    %v1433 = vunpack.c.l.b16 %v1201
    %v1434 = vunpack.c.l.b16 %v1202
    %v1435 = vunpack.c.l.b16 %v1203
    %v1436 = vunpack.c.l.b16 %v1204
    %v1437 = vunpack.c.l.b16 %v1205
    %v1438 = vunpack.c.l.b16 %v1206
    %v1439 = vunpack.c.l.b16 %v1207
    %v1440 = vunpack.c.l.b16 %v1208
    %v1441 = vunpack.c.l.b16 %v1209
    %v1442 = vunpack.c.l.b16 %v1210
    %v1443 = vunpack.c.l.b16 %v1211
    %v1444 = vunpack.c.l.b16 %v1212
    %v1445 = vpack.c.b16 %v1430, %v1429
    %v1446 = vpack.c.b16 %v1432, %v1431
    %v1447 = vpack.c.b16 %v1434, %v1433
    %v1448 = vpack.c.b16 %v1436, %v1435
    %v1449 = vpack.c.b16 %v1438, %v1437
    %v1450 = vpack.c.b16 %v1440, %v1439
    %v1451 = vpack.c.b16 %v1442, %v1441
    %v1452 = vpack.c.b16 %v1444, %v1443
    %1461 = vmatprep.subr.bf16.mxu0 0
    %1462 = vmatpush1.bf16.msra.mxu0 %v1445
    %1463 = vmatprep.subr.bf16.mxu0 0
    %1464 = vmatpush1.bf16.msra.mxu0 %v1446
    %1465 = vmatprep.subr.bf16.mxu0 0
    %1466 = vmatpush1.bf16.msra.mxu0 %v1447
    %1467 = vmatprep.subr.bf16.mxu0 0
    %1468 = vmatpush1.bf16.msra.mxu0 %v1448
    %1469 = vmatprep.subr.bf16.mxu0 0
    %1470 = vmatpush1.bf16.msra.mxu0 %v1449
    %1471 = vmatprep.subr.bf16.mxu0 0
    %1472 = vmatpush1.bf16.msra.mxu0 %v1450
    %1473 = vmatprep.subr.bf16.mxu0 0
    %1474 = vmatpush1.bf16.msra.mxu0 %v1451
    %1475 = vmatprep.subr.bf16.mxu0 0
    %1476 = vmatpush1.bf16.msra.mxu0 %v1452
    %1477 = vmatprep.subr.bf16.mxu0 0
    %1478 = vmatpush1.bf16.msra.mxu0 0
    %1479 = vmatprep.subr.bf16.mxu0 0
    %1480 = vmatpush1.bf16.msra.mxu0 0
    %1481 = vmatprep.subr.bf16.mxu0 0
    %1482 = vmatpush1.bf16.msra.mxu0 0
    %1483 = vmatprep.subr.bf16.mxu0 0
    %1484 = vmatpush1.bf16.msra.mxu0 0
    %1485 = vmatprep.subr.bf16.mxu0 0
    %1486 = vmatpush1.bf16.msra.mxu0 0
    %1487 = vmatprep.subr.bf16.mxu0 0
    %1488 = vmatpush1.bf16.msra.mxu0 0
    %1489 = vmatprep.subr.bf16.mxu0 0
    %1490 = vmatpush1.bf16.msra.mxu0 0
    %1491 = vmatprep.subr.bf16.mxu0 0
    %1492 = vmatpush1.bf16.msra.mxu0 0
    %1493 = vmatprep.mubr.bf16.mxu0 0
    %1494 = vmatmul.mubr.bf16.gmra.mrb[0].mxu0 %v1406
    %v1495 = vpop.f32.mrb[0].mxu0
    %v1496 = vadd.f32 %v1411, %v1495
    %v1497 = vpop.f32.mrb[0].mxu0
    %v1498 = vpop.f32.mrb[0].mxu0
    %v1499 = vpop.f32.mrb[0].mxu0
    %1500 = vdwg.mxu0
    %v1501 = vsub.f32 %v1158, %v210
    %v1502 = vsub.f32 %v1496, %v210
    %v1503 = vmul.f32 %v1501, %v1501
    %1504 = vadd.xlane.f32.xlu0 %v1503
    %v1505 = vpop.xlane.xlu0 %1504
    %v1506 = vrot.slane %v1505, 4
    %v1507 = vadd.f32 %v1505, %v1506
    %v1508 = vrot.slane %v1507, 2
    %v1509 = vadd.f32 %v1507, %v1508
    %v1510 = vrot.slane %v1509, 1
    %v1511 = vadd.f32 %v1509, %v1510
    %s1512 = vtos %v1511
    %v1513 = vmul.f32 %v1502, %v1502
    %1514 = vadd.xlane.f32.xlu0 %v1513
    %v1515 = vpop.xlane.xlu0 %1514
    %v1516 = vrot.slane %v1515, 4
    %v1517 = vadd.f32 %v1515, %v1516
    %v1518 = vrot.slane %v1517, 2
    %v1519 = vadd.f32 %v1517, %v1518
    %v1520 = vrot.slane %v1519, 1
    %v1521 = vadd.f32 %v1519, %v1520
    %s1522 = vtos %v1521
    %s1523 = sadd.f32 %s1512, %s1522
    %s1524 = smul.f32 %s1523, 0.0078125
    %v1525 = vstv %s1524
    %vm1526 = vcmask 0
    %1527 = vst.msk [vmem:[#allocation21] sm:$0x1] %vm1526, %v1525
    // Predicated region
    $region130: #{tpu_custom_call.1} parent=1 // pred_check
      _
    $region131: #{tpu_custom_call.1} parent=1 // pred_check_branch
      %1529 = sbr.rel (0) target = $region133
    $region132: #{tpu_custom_call.1} parent=1 // pred_region
      %s1531 = ssub.s32 16, 16
      %1532 = vsyncadd [#allocation5], %s1531
      %s1534 = sshll.u32 [#allocation20], 4
      %s1535 = int_to_ptr.vmem [resolvable:$true] %s1534
      %1537 = dma.vmem_to_hbm [thread:$0]  %s1535, 16, %s22, [#allocation5]
    $region133: #{tpu_custom_call.1} parent=1 // pred_fallthru
      _
    // Predicated region
    $region134: #{tpu_custom_call.1} parent=1 // pred_check
      _
    $region135: #{tpu_custom_call.1} parent=1 // pred_check_branch
      %1539 = sbr.rel (0) target = $region137
    $region136: #{tpu_custom_call.1} parent=1 // pred_region
      %s1541 = ssub.s32 16, 16
      %1542 = vsyncadd [#allocation22], %s1541
      %s1544 = sshll.u32 [#allocation21], 4
      %s1545 = int_to_ptr.vmem [resolvable:$true] %s1544
      %1547 = dma.vmem_to_hbm [thread:$0]  %s1545, 16, %s23, [#allocation22]
    $region137: #{tpu_custom_call.1} parent=1 // pred_fallthru
      _
    // Predicated region
    $region138: #{tpu_custom_call.1} parent=1 // pred_check
      _
    $region139: #{tpu_custom_call.1} parent=1 // pred_check_branch
      %1549 = sbr.rel (0) target = $region141
    $region140: #{tpu_custom_call.1} parent=1 // pred_region
      %1550 = dma.done [#allocation5], 16
    $region141: #{tpu_custom_call.1} parent=1 // pred_fallthru
      _
    // Predicated region
    $region142: #{tpu_custom_call.1} parent=1 // pred_check
      _
    $region143: #{tpu_custom_call.1} parent=1 // pred_check_branch
      %1552 = sbr.rel (0) target = $region145
    $region144: #{tpu_custom_call.1} parent=1 // pred_region
      %1553 = dma.done [#allocation22], 16
    $region145: #{tpu_custom_call.1} parent=1 // pred_fallthru
      _
    %1554 = vsyncpa [#allocation4], 1
    %1555 = vsyncpa [#allocation7], 1
    %1556 = vsyncpa [#allocation10], 1
    %1557 = vsyncpa [#allocation13], 1
    %1558 = vsyncpa [#allocation16], 1
    %1559 = vsyncpa [#allocation19], 1
    %1560 = vsyncpa [#allocation5], 1
    %1561 = vsyncpa [#allocation22], 1

</llo_original>
